<compile_context>
chip_gen: v5e
topology: v5e:2x2
jax: 0.10.0
libtpu: 0.0.40
codegen_flags: <defaults>
</compile_context>

<pallas_src>
import math

import jax
import jax.numpy as jnp
from jax.experimental import pallas as pl
from jax.experimental.pallas import tpu as pltpu


# --------------------- fused all-layer encoder kernel -----------------------
def make_encoder_kernel(n_heads):
    H = n_heads

    def kernel(x_ref, mask_ref, cos_ref, sin_ref,
               wqkv_ref, bqkv_ref, wo_ref, bo_ref, g1_ref, be1_ref,
               w1_ref, bf1_ref, w2_ref, bf2_ref, g2_ref, be2_ref,
               out_ref, attn_ref,
               x_scratch):
        Bt, L, D = x_ref.shape
        dk = D // H
        M = Bt * L
        scale = 1.0 / math.sqrt(dk)
        layer = pl.program_id(1)

        # ---- layer 0: load embeddings, apply RoPE, park activations in VMEM ----
        @pl.when(layer == 0)
        def _():
            half = D // 2
            x2 = x_ref[...].reshape(M, D)                       # f32 rows
            cos = jnp.tile(cos_ref[...], (Bt, 1))               # (M, D)
            sin = jnp.tile(sin_ref[...], (Bt, 1))               # sign-folded
            # rotate-half RoPE: out = x*cos + roll(x, D/2)*sin  (XLU roll)
            x_scratch[...] = x2 * cos + pltpu.roll(x2, shift=half, axis=1) * sin

        # Activations live in VMEM scratch across the whole layer loop.
        x2 = x_scratch[...]                                     # (M, D) f32
        xb = x2.astype(jnp.bfloat16)

        # ---- fused QKV projection: one (M, D) x (D, 3D) MXU matmul ----
        qkv = jnp.dot(xb, wqkv_ref[...], preferred_element_type=jnp.float32)
        qkv = qkv + bqkv_ref[...]                               # (M, 3D) f32

        def split_heads(t):                                     # (M, D) -> (Bt*H, L, dk)
            t = t.reshape(Bt, L, H, dk)
            t = jnp.transpose(t, (0, 2, 1, 3))
            return t.reshape(Bt * H, L, dk)

        qh = split_heads(qkv[:, :D]).astype(jnp.bfloat16)
        kh = split_heads(qkv[:, D:2 * D]).astype(jnp.bfloat16)
        vh = split_heads(qkv[:, 2 * D:]).astype(jnp.bfloat16)

        # ---- head-batched attention (f32 softmax) ----
        s = jnp.einsum('bqd,bkd->bqk', qh, kh,
                       preferred_element_type=jnp.float32) * scale     # (Bt*H, L, L)
        s = s.reshape(Bt, H, L, L) + mask_ref[...][:, None, :, :]      # key-pad bias
        s = s - jnp.max(s, axis=-1, keepdims=True)
        p = jnp.exp(s)
        a = p * pl.reciprocal(jnp.sum(p, axis=-1, keepdims=True), approx=True)
        attn_ref[...] = a                                       # (Bt, H, L, L) f32

        ctx = jnp.einsum('bqk,bkd->bqd',
                         a.reshape(Bt * H, L, L).astype(jnp.bfloat16), vh,
                         preferred_element_type=jnp.float32)    # (Bt*H, L, dk)
        ctx = jnp.transpose(ctx.reshape(Bt, H, L, dk), (0, 2, 1, 3)).reshape(M, D)

        proj = jnp.dot(ctx.astype(jnp.bfloat16), wo_ref[...],
                       preferred_element_type=jnp.float32) + bo_ref[...]

        # residual + LayerNorm 1 (post-norm), eps = 1e-6, all f32
        y = proj + x2
        mu = jnp.mean(y, axis=-1, keepdims=True)
        var = jnp.mean((y - mu) ** 2, axis=-1, keepdims=True)
        y = (y - mu) * jax.lax.rsqrt(var + 1e-6) * g1_ref[...] + be1_ref[...]

        # ---- feedforward (Linear-ReLU-Linear) ----
        hid = jnp.dot(y.astype(jnp.bfloat16), w1_ref[...],
                      preferred_element_type=jnp.float32) + bf1_ref[...]
        hid = jnp.maximum(hid, 0.0)
        f = jnp.dot(hid.astype(jnp.bfloat16), w2_ref[...],
                    preferred_element_type=jnp.float32) + bf2_ref[...]

        # residual + LayerNorm 2
        z = f + y
        mu2 = jnp.mean(z, axis=-1, keepdims=True)
        var2 = jnp.mean((z - mu2) ** 2, axis=-1, keepdims=True)
        z = (z - mu2) * jax.lax.rsqrt(var2 + 1e-6) * g2_ref[...] + be2_ref[...]

        x_scratch[...] = z                                      # feed next layer
        out_ref[...] = z.reshape(Bt, L, D)                      # written back to HBM
                                                                # once per batch tile

    return kernel


def encoder_stack(x, mask_bias, cos, sin, stacked, n_heads, n_layers,
                  batch_tile=None):
    """Run all encoder layers in one pallas_call (layer axis = inner grid)."""
    B, L, D = x.shape
    F = stacked["w1"].shape[2]
    Bt = B if batch_tile is None else batch_tile
    assert B % Bt == 0, "batch_tile must divide batch"
    nb = B // Bt

    def per_layer(shape):
        nd = len(shape)
        return pl.BlockSpec((pl.Squeezed(),) + shape,
                            lambda b, l, nd=nd: (l,) + (0,) * nd)

    def const2d(shape):
        return pl.BlockSpec(shape, lambda b, l: (0, 0))

    in_specs = [
        pl.BlockSpec((Bt, L, D), lambda b, l: (b, 0, 0)),       # embeddings
        pl.BlockSpec((Bt, 1, L), lambda b, l: (b, 0, 0)),       # key-pad bias
        const2d((L, D)),                                        # cos table
        const2d((L, D)),                                        # sin table (sign-folded)
        per_layer((D, 3 * D)), per_layer((1, 3 * D)),           # Wqkv (fused), bqkv
        per_layer((D, D)), per_layer((1, D)),                   # Wo, bo
        per_layer((1, D)), per_layer((1, D)),                   # LN1 gamma, beta
        per_layer((D, F)), per_layer((1, F)),                   # W1, b1
        per_layer((F, D)), per_layer((1, D)),                   # W2, b2
        per_layer((1, D)), per_layer((1, D)),                   # LN2 gamma, beta
    ]
    args = [x, mask_bias, cos, sin,
            stacked["wqkv"], stacked["bqkv"], stacked["wo"], stacked["bo"],
            stacked["g1"], stacked["be1"], stacked["w1"], stacked["bf1"],
            stacked["w2"], stacked["bf2"], stacked["g2"], stacked["be2"]]

    out, attn = pl.pallas_call(
        make_encoder_kernel(n_heads),
        out_shape=(jax.ShapeDtypeStruct((B, L, D), jnp.float32),
                   jax.ShapeDtypeStruct((n_layers * B, n_heads, L, L),
                                        jnp.float32)),
        grid=(nb, n_layers),
        in_specs=in_specs,
        out_specs=(pl.BlockSpec((Bt, L, D), lambda b, l: (b, 0, 0)),
                   pl.BlockSpec((Bt, n_heads, L, L),
                                lambda b, l: (l * nb + b, 0, 0, 0))),
        scratch_shapes=[pltpu.VMEM((Bt * L, D), jnp.float32)],
        compiler_params=pltpu.CompilerParams(
            dimension_semantics=("parallel", "arbitrary"),
            vmem_limit_bytes=32 * 1024 * 1024),
    )(*args)
    return out, attn


# --------------------------------- glue --------------------------------------
def mask_key_bias(tokens):
    """Pad token id 0 on the key axis -> additive -1e9 bias, shape (B, 1, L)."""
    return jnp.where(tokens == 0, -1e9, 0.0).astype(jnp.float32)[:, None, :]


def rope_tables(seq_len, dim):
    """Full-width cos / sign-folded sin tables so rotate-half == roll(x, D/2)."""
    half = dim // 2
    inv_freq = 1.0 / (10000.0 ** (jnp.arange(half, dtype=jnp.float32) / half))
    ang = jnp.arange(seq_len, dtype=jnp.float32)[:, None] * inv_freq[None, :]
    c, s = jnp.cos(ang), jnp.sin(ang)                     # (L, D/2)
    cos_full = jnp.concatenate([c, c], axis=-1)           # (L, D)
    sin_full = jnp.concatenate([-s, s], axis=-1)          # sign folded
    return cos_full, sin_full


def prepare_stacked_params(layer_params):
    """Stack per-layer params along a leading layer axis; fuse QKV; bf16 weights."""
    def stack(fn, dtype=None):
        arr = jnp.stack([fn(p) for p in layer_params], axis=0)
        return arr.astype(dtype) if dtype is not None else arr

    return {
        "wqkv": stack(lambda p: jnp.concatenate([p["wq"], p["wk"], p["wv"]], axis=1),
                      jnp.bfloat16),
        "bqkv": stack(lambda p: jnp.concatenate([p["bq"], p["bk"], p["bv"]], axis=1)),
        "wo": stack(lambda p: p["wo"], jnp.bfloat16), "bo": stack(lambda p: p["bo"]),
        "g1": stack(lambda p: p["g1"]), "be1": stack(lambda p: p["be1"]),
        "w1": stack(lambda p: p["w1"], jnp.bfloat16), "bf1": stack(lambda p: p["bf1"]),
        "w2": stack(lambda p: p["w2"], jnp.bfloat16), "bf2": stack(lambda p: p["bf2"]),
        "g2": stack(lambda p: p["g2"]), "be2": stack(lambda p: p["be2"]),
    }


def init_layer_params(key, dim, ff_dim):
    ks = jax.random.split(key, 6)
    std = 0.02
    return {
        "wq": std * jax.random.normal(ks[0], (dim, dim), jnp.float32),
        "bq": jnp.zeros((1, dim), jnp.float32),
        "wk": std * jax.random.normal(ks[1], (dim, dim), jnp.float32),
        "bk": jnp.zeros((1, dim), jnp.float32),
        "wv": std * jax.random.normal(ks[2], (dim, dim), jnp.float32),
        "bv": jnp.zeros((1, dim), jnp.float32),
        "wo": std * jax.random.normal(ks[3], (dim, dim), jnp.float32),
        "bo": jnp.zeros((1, dim), jnp.float32),
        "g1": jnp.ones((1, dim), jnp.float32),
        "be1": jnp.zeros((1, dim), jnp.float32),
        "w1": std * jax.random.normal(ks[4], (dim, ff_dim), jnp.float32),
        "bf1": jnp.zeros((1, ff_dim), jnp.float32),
        "w2": std * jax.random.normal(ks[5], (ff_dim, dim), jnp.float32),
        "bf2": jnp.zeros((1, dim), jnp.float32),
        "g2": jnp.ones((1, dim), jnp.float32),
        "be2": jnp.zeros((1, dim), jnp.float32),
    }


def init_encoder_params(key, vocab, emb_dim, ff_dim, n_layers):
    keys = jax.random.split(key, n_layers + 1)
    emb = 0.02 * jax.random.normal(keys[0], (vocab, emb_dim), jnp.float32)
    layers = [init_layer_params(keys[i + 1], emb_dim, ff_dim) for i in range(n_layers)]
    return {"embedding": emb, "layers": layers}


def encoder_forward(params, tokens, n_heads, batch_tile=None):
    B, L = tokens.shape
    D = params["embedding"].shape[1]
    n_layers = len(params["layers"])

    mask_bias = mask_key_bias(tokens)                     # (B, 1, L), not (B, L, L)
    # TODO(synk): token-id embedding gather stays in plain JAX (data-dependent gather).
    x = (jnp.take(params["embedding"], tokens, axis=0) * math.sqrt(D)).astype(jnp.float32)
    cos, sin = rope_tables(L, D)                          # consumed at layer 0 in-kernel

    stacked = prepare_stacked_params(params["layers"])
    out, attn = encoder_stack(x, mask_bias, cos, sin, stacked, n_heads, n_layers,
                              batch_tile=batch_tile)
    attn = attn.reshape(n_layers, B, n_heads, L, L)
    attentions = [attn[i] for i in range(n_layers)]
    return out, attentions


# --------------------------------- main ---------------------------------------
if __name__ == "__main__":
    vocab, emb_dim, ff_dim = 50, 32, 64
    n_layers, n_heads = 2, 4
    B, L = 2, 8

    key = jax.random.PRNGKey(0)
    k_tok, k_par = jax.random.split(key)

    tokens = jax.random.randint(k_tok, (B, L), 1, vocab, dtype=jnp.int32)
    tokens = tokens.at[:, -2:].set(0)   # pad tokens to exercise the key mask

    params = init_encoder_params(k_par, vocab, emb_dim, ff_dim, n_layers)

    outputs, attentions = encoder_forward(params, tokens, n_heads)
    outputs = jax.block_until_ready(outputs)
    attentions = [jax.block_until_ready(a) for a in attentions]

    assert outputs.shape == (B, L, emb_dim)
    assert all(a.shape == (B, n_heads, L, L) for a in attentions)
    assert bool(jnp.all(jnp.isfinite(outputs)))
    assert all(bool(jnp.all(jnp.isfinite(a))) for a in attentions)
    print("KERNEL_OK")
</pallas_src>

<mosaic_0001>
module attributes {stable_mosaic.version = 11 : i64} {
  func.func @kernel(%arg0: i32, %arg1: i32, %arg2: memref<2x8x32xf32, #tpu.memory_space<vmem>>, %arg3: memref<2x1x8xf32, #tpu.memory_space<vmem>>, %arg4: memref<8x32xf32, #tpu.memory_space<vmem>>, %arg5: memref<8x32xf32, #tpu.memory_space<vmem>>, %arg6: memref<1x32x96xbf16, #tpu.memory_space<vmem>>, %arg7: memref<1x1x96xf32, #tpu.memory_space<vmem>>, %arg8: memref<1x32x32xbf16, #tpu.memory_space<vmem>>, %arg9: memref<1x1x32xf32, #tpu.memory_space<vmem>>, %arg10: memref<1x1x32xf32, #tpu.memory_space<vmem>>, %arg11: memref<1x1x32xf32, #tpu.memory_space<vmem>>, %arg12: memref<1x32x64xbf16, #tpu.memory_space<vmem>>, %arg13: memref<1x1x64xf32, #tpu.memory_space<vmem>>, %arg14: memref<1x64x32xbf16, #tpu.memory_space<vmem>>, %arg15: memref<1x1x32xf32, #tpu.memory_space<vmem>>, %arg16: memref<1x1x32xf32, #tpu.memory_space<vmem>>, %arg17: memref<1x1x32xf32, #tpu.memory_space<vmem>>, %arg18: memref<2x8x32xf32, #tpu.memory_space<vmem>>, %arg19: memref<2x4x8x8xf32, #tpu.memory_space<vmem>>, %arg20: memref<16x32xf32, #tpu.memory_space<vmem>>) attributes {dimension_semantics = [#tpu.dimension_semantics<parallel>, #tpu.dimension_semantics<arbitrary>], iteration_bounds = array<i64: 1, 2>, scalar_prefetch = 0 : i64, scratch_operands = 1 : i64, tpu.core_type = #tpu.core_type<tc>, window_params = [{transform_indices = @transform_0, window_bounds = array<i64: 2, 8, 32>}, {transform_indices = @transform_1, window_bounds = array<i64: 2, 1, 8>}, {pipeline_mode = #tpu.pipeline_mode<synchronous>, transform_indices = @transform_2, window_bounds = array<i64: 8, 32>}, {pipeline_mode = #tpu.pipeline_mode<synchronous>, transform_indices = @transform_3, window_bounds = array<i64: 8, 32>}, {transform_indices = @transform_4, window_bounds = array<i64: 1, 32, 96>}, {transform_indices = @transform_5, window_bounds = array<i64: 1, 1, 96>}, {transform_indices = @transform_6, window_bounds = array<i64: 1, 32, 32>}, {transform_indices = @transform_7, window_bounds = array<i64: 1, 1, 32>}, {transform_indices = @transform_8, window_bounds = array<i64: 1, 1, 32>}, {transform_indices = @transform_9, window_bounds = array<i64: 1, 1, 32>}, {transform_indices = @transform_10, window_bounds = array<i64: 1, 32, 64>}, {transform_indices = @transform_11, window_bounds = array<i64: 1, 1, 64>}, {transform_indices = @transform_12, window_bounds = array<i64: 1, 64, 32>}, {transform_indices = @transform_13, window_bounds = array<i64: 1, 1, 32>}, {transform_indices = @transform_14, window_bounds = array<i64: 1, 1, 32>}, {transform_indices = @transform_15, window_bounds = array<i64: 1, 1, 32>}, {transform_indices = @transform_16, window_bounds = array<i64: 2, 8, 32>}, {transform_indices = @transform_17, window_bounds = array<i64: 2, 4, 8, 8>}]} {
    %c0_i32 = arith.constant 0 : i32
    %0 = arith.cmpi eq, %arg1, %c0_i32 : i32
    %1 = arith.extui %0 : i1 to i32
    %c0_i32_0 = arith.constant 0 : i32
    %2 = arith.cmpi ne, %1, %c0_i32_0 : i32
    scf.if %2 {
      %c0_69 = arith.constant 0 : index
      %c0_70 = arith.constant 0 : index
      %c0_71 = arith.constant 0 : index
      %135 = vector.load %arg2[%c0_69, %c0_70, %c0_71] : memref<2x8x32xf32, #tpu.memory_space<vmem>>, vector<2x8x32xf32>
      %136 = vector.shape_cast %135 : vector<2x8x32xf32> to vector<16x32xf32>
      %c0_72 = arith.constant 0 : index
      %c0_73 = arith.constant 0 : index
      %137 = vector.load %arg4[%c0_72, %c0_73] : memref<8x32xf32, #tpu.memory_space<vmem>>, vector<8x32xf32>
      %138 = tpu.concatenate %137, %137 in 0 : vector<8x32xf32>, vector<8x32xf32> -> vector<16x32xf32>
      %c0_74 = arith.constant 0 : index
      %c0_75 = arith.constant 0 : index
      %139 = vector.load %arg5[%c0_74, %c0_75] : memref<8x32xf32, #tpu.memory_space<vmem>>, vector<8x32xf32>
      %140 = tpu.concatenate %139, %139 in 0 : vector<8x32xf32>, vector<8x32xf32> -> vector<16x32xf32>
      %141 = arith.mulf %136, %138 : vector<16x32xf32>
      %c16_i32 = arith.constant 16 : i32
      %142 = tpu.dynamic_rotate %136 by %c16_i32 dim 1 : vector<16x32xf32>, i32 -> vector<16x32xf32>
      %143 = arith.mulf %142, %140 : vector<16x32xf32>
      %144 = arith.addf %141, %143 : vector<16x32xf32>
      %c0_76 = arith.constant 0 : index
      %c0_77 = arith.constant 0 : index
      %145 = vector.load %arg20[%c0_76, %c0_77] : memref<16x32xf32, #tpu.memory_space<vmem>>, vector<16x32xf32>
      tpu.vector_store %arg20[%c0_76, %c0_77], %144 {strides = array<i32>} : memref<16x32xf32, #tpu.memory_space<vmem>>, vector<16x32xf32>,
    } else {
    }
    %c0 = arith.constant 0 : index
    %c0_1 = arith.constant 0 : index
    %3 = vector.load %arg20[%c0, %c0_1] : memref<16x32xf32, #tpu.memory_space<vmem>>, vector<16x32xf32>
    %4 = arith.truncf %3 : vector<16x32xf32> to vector<16x32xbf16>
    %c0_2 = arith.constant 0 : index
    %c0_3 = arith.constant 0 : index
    %c0_4 = arith.constant 0 : index
    %5 = vector.load %arg6[%c0_2, %c0_3, %c0_4] : memref<1x32x96xbf16, #tpu.memory_space<vmem>>, vector<1x32x96xbf16>
    %6 = vector.shape_cast %5 : vector<1x32x96xbf16> to vector<32x96xbf16>
    %cst = arith.constant dense<0.000000e+00> : vector<16x96xf32>
    %7 = tpu.matmul %4, %6, %cst {dimension_numbers = #tpu.dot_dimension_numbers<[1], [0], [0], [1], [0, 0, 1, 1], [], []>} : vector<16x32xbf16>, vector<32x96xbf16>, vector<16x96xf32> -> vector<16x96xf32>
    %c0_5 = arith.constant 0 : index
    %c0_6 = arith.constant 0 : index
    %c0_7 = arith.constant 0 : index
    %8 = vector.load %arg7[%c0_5, %c0_6, %c0_7] : memref<1x1x96xf32, #tpu.memory_space<vmem>>, vector<1x1x96xf32>
    %9 = vector.shape_cast %8 : vector<1x1x96xf32> to vector<1x96xf32>
    %10 = vector.broadcast %9 : vector<1x96xf32> to vector<16x96xf32>
    %11 = arith.addf %7, %10 : vector<16x96xf32>
    %12 = vector.extract_strided_slice %11 {offsets = [0, 0], sizes = [16, 32], strides = [1, 1]} : vector<16x96xf32> to vector<16x32xf32>
    %13 = vector.shape_cast %12 : vector<16x32xf32> to vector<2x8x4x8xf32>
    %14 = tpu.transpose %13, [0, 2, 1, 3] : vector<2x8x4x8xf32> -> vector<2x4x8x8xf32>
    %15 = vector.shape_cast %14 : vector<2x4x8x8xf32> to vector<8x8x8xf32>
    %16 = arith.truncf %15 : vector<8x8x8xf32> to vector<8x8x8xbf16>
    %17 = vector.extract_strided_slice %11 {offsets = [0, 32], sizes = [16, 32], strides = [1, 1]} : vector<16x96xf32> to vector<16x32xf32>
    %18 = vector.shape_cast %17 : vector<16x32xf32> to vector<2x8x4x8xf32>
    %19 = tpu.transpose %18, [0, 2, 1, 3] : vector<2x8x4x8xf32> -> vector<2x4x8x8xf32>
    %20 = vector.shape_cast %19 : vector<2x4x8x8xf32> to vector<8x8x8xf32>
    %21 = arith.truncf %20 : vector<8x8x8xf32> to vector<8x8x8xbf16>
    %22 = vector.extract_strided_slice %11 {offsets = [0, 64], sizes = [16, 32], strides = [1, 1]} : vector<16x96xf32> to vector<16x32xf32>
    %23 = vector.shape_cast %22 : vector<16x32xf32> to vector<2x8x4x8xf32>
    %24 = tpu.transpose %23, [0, 2, 1, 3] : vector<2x8x4x8xf32> -> vector<2x4x8x8xf32>
    %25 = vector.shape_cast %24 : vector<2x4x8x8xf32> to vector<8x8x8xf32>
    %26 = arith.truncf %25 : vector<8x8x8xf32> to vector<8x8x8xbf16>
    "tpu.trace_start"() <{level = 10 : i32, message = "bqd,bkd->bqk"}> : () -> ()
    %cst_8 = arith.constant dense<0.000000e+00> : vector<8x8x8xf32>
    %27 = tpu.matmul %16, %21, %cst_8 {dimension_numbers = #tpu.dot_dimension_numbers<[2], [2], [1], [1], [0, 0, 0, 1, 1, 1], [0], [0]>} : vector<8x8x8xbf16>, vector<8x8x8xbf16>, vector<8x8x8xf32> -> vector<8x8x8xf32>
    "tpu.trace_stop"() : () -> ()
    %cst_9 = arith.constant 0.353553385 : f32
    %28 = vector.broadcast %cst_9 : f32 to vector<8x8x8xf32>
    %29 = arith.mulf %27, %28 : vector<8x8x8xf32>
    %30 = vector.shape_cast %29 : vector<8x8x8xf32> to vector<2x4x8x8xf32>
    %c0_10 = arith.constant 0 : index
    %c0_11 = arith.constant 0 : index
    %c0_12 = arith.constant 0 : index
    %31 = vector.load %arg3[%c0_10, %c0_11, %c0_12] : memref<2x1x8xf32, #tpu.memory_space<vmem>>, vector<2x1x8xf32>
    %32 = vector.shape_cast %31 : vector<2x1x8xf32> to vector<2x1x1x8xf32>
    %33 = vector.broadcast %32 : vector<2x1x1x8xf32> to vector<2x4x8x8xf32>
    %34 = arith.addf %30, %33 : vector<2x4x8x8xf32>
    %cst_13 = arith.constant dense<0xFF800000> : vector<2x4x8xf32>
    %35 = vector.multi_reduction <maximumf>, %34, %cst_13 [3] : vector<2x4x8x8xf32> to vector<2x4x8xf32>
    %36 = vector.shape_cast %35 : vector<2x4x8xf32> to vector<2x4x8x1xf32>
    %37 = vector.broadcast %36 : vector<2x4x8x1xf32> to vector<2x4x8x8xf32>
    %38 = arith.subf %34, %37 : vector<2x4x8x8xf32>
    %39 = math.exp %38 : vector<2x4x8x8xf32>
    %cst_14 = arith.constant dense<0.000000e+00> : vector<2x4x8xf32>
    %40 = vector.multi_reduction <add>, %39, %cst_14 [3] : vector<2x4x8x8xf32> to vector<2x4x8xf32>
    %41 = vector.shape_cast %40 : vector<2x4x8xf32> to vector<2x4x8x1xf32>
    %42 = tpu.reciprocal %41 {approx = true} : vector<2x4x8x1xf32> -> vector<2x4x8x1xf32>
    %43 = vector.broadcast %42 : vector<2x4x8x1xf32> to vector<2x4x8x8xf32>
    %44 = arith.mulf %39, %43 : vector<2x4x8x8xf32>
    %c0_15 = arith.constant 0 : index
    %c0_16 = arith.constant 0 : index
    %c0_17 = arith.constant 0 : index
    %c0_18 = arith.constant 0 : index
    %45 = vector.load %arg19[%c0_15, %c0_16, %c0_17, %c0_18] : memref<2x4x8x8xf32, #tpu.memory_space<vmem>>, vector<2x4x8x8xf32>
    tpu.vector_store %arg19[%c0_15, %c0_16, %c0_17, %c0_18], %44 {strides = array<i32>} : memref<2x4x8x8xf32, #tpu.memory_space<vmem>>, vector<2x4x8x8xf32>,
    %46 = vector.shape_cast %44 : vector<2x4x8x8xf32> to vector<8x8x8xf32>
    %47 = arith.truncf %46 : vector<8x8x8xf32> to vector<8x8x8xbf16>
    "tpu.trace_start"() <{level = 10 : i32, message = "bqk,bkd->bqd"}> : () -> ()
    %cst_19 = arith.constant dense<0.000000e+00> : vector<8x8x8xf32>
    %48 = tpu.matmul %47, %26, %cst_19 {dimension_numbers = #tpu.dot_dimension_numbers<[2], [1], [1], [2], [0, 0, 0, 1, 1, 2], [0], [0]>} : vector<8x8x8xbf16>, vector<8x8x8xbf16>, vector<8x8x8xf32> -> vector<8x8x8xf32>
    "tpu.trace_stop"() : () -> ()
    %49 = vector.shape_cast %48 : vector<8x8x8xf32> to vector<2x4x8x8xf32>
    %50 = tpu.transpose %49, [0, 2, 1, 3] : vector<2x4x8x8xf32> -> vector<2x8x4x8xf32>
    %51 = vector.shape_cast %50 : vector<2x8x4x8xf32> to vector<16x32xf32>
    %52 = arith.truncf %51 : vector<16x32xf32> to vector<16x32xbf16>
    %c0_20 = arith.constant 0 : index
    %c0_21 = arith.constant 0 : index
    %c0_22 = arith.constant 0 : index
    %53 = vector.load %arg8[%c0_20, %c0_21, %c0_22] : memref<1x32x32xbf16, #tpu.memory_space<vmem>>, vector<1x32x32xbf16>
    %54 = vector.shape_cast %53 : vector<1x32x32xbf16> to vector<32x32xbf16>
    %cst_23 = arith.constant dense<0.000000e+00> : vector<16x32xf32>
    %55 = tpu.matmul %52, %54, %cst_23 {dimension_numbers = #tpu.dot_dimension_numbers<[1], [0], [0], [1], [0, 0, 1, 1], [], []>} : vector<16x32xbf16>, vector<32x32xbf16>, vector<16x32xf32> -> vector<16x32xf32>
    %c0_24 = arith.constant 0 : index
    %c0_25 = arith.constant 0 : index
    %c0_26 = arith.constant 0 : index
    %56 = vector.load %arg9[%c0_24, %c0_25, %c0_26] : memref<1x1x32xf32, #tpu.memory_space<vmem>>, vector<1x1x32xf32>
    %57 = vector.shape_cast %56 : vector<1x1x32xf32> to vector<1x32xf32>
    %58 = vector.broadcast %57 : vector<1x32xf32> to vector<16x32xf32>
    %59 = arith.addf %55, %58 : vector<16x32xf32>
    %60 = arith.addf %59, %3 : vector<16x32xf32>
    %cst_27 = arith.constant dense<0.000000e+00> : vector<16xf32>
    %61 = vector.multi_reduction <add>, %60, %cst_27 [1] : vector<16x32xf32> to vector<16xf32>
    %62 = vector.shape_cast %61 : vector<16xf32> to vector<16x1xf32>
    %cst_28 = arith.constant 3.200000e+01 : f32
    %63 = vector.broadcast %cst_28 : f32 to vector<16x1xf32>
    %64 = arith.divf %62, %63 : vector<16x1xf32>
    %65 = vector.broadcast %64 : vector<16x1xf32> to vector<16x32xf32>
    %66 = arith.subf %60, %65 : vector<16x32xf32>
    %67 = arith.mulf %66, %66 : vector<16x32xf32>
    %cst_29 = arith.constant dense<0.000000e+00> : vector<16xf32>
    %68 = vector.multi_reduction <add>, %67, %cst_29 [1] : vector<16x32xf32> to vector<16xf32>
    %69 = vector.shape_cast %68 : vector<16xf32> to vector<16x1xf32>
    %cst_30 = arith.constant 3.200000e+01 : f32
    %70 = vector.broadcast %cst_30 : f32 to vector<16x1xf32>
    %71 = arith.divf %69, %70 : vector<16x1xf32>
    %72 = vector.broadcast %64 : vector<16x1xf32> to vector<16x32xf32>
    %73 = arith.subf %60, %72 : vector<16x32xf32>
    %cst_31 = arith.constant 9.99999997E-7 : f32
    %74 = vector.broadcast %cst_31 : f32 to vector<16x1xf32>
    %75 = arith.addf %71, %74 : vector<16x1xf32>
    %76 = math.rsqrt %75 : vector<16x1xf32>
    %77 = vector.broadcast %76 : vector<16x1xf32> to vector<16x32xf32>
    %78 = arith.mulf %73, %77 : vector<16x32xf32>
    %c0_32 = arith.constant 0 : index
    %c0_33 = arith.constant 0 : index
    %c0_34 = arith.constant 0 : index
    %79 = vector.load %arg10[%c0_32, %c0_33, %c0_34] : memref<1x1x32xf32, #tpu.memory_space<vmem>>, vector<1x1x32xf32>
    %80 = vector.shape_cast %79 : vector<1x1x32xf32> to vector<1x32xf32>
    %81 = vector.broadcast %80 : vector<1x32xf32> to vector<16x32xf32>
    %82 = arith.mulf %78, %81 : vector<16x32xf32>
    %c0_35 = arith.constant 0 : index
    %c0_36 = arith.constant 0 : index
    %c0_37 = arith.constant 0 : index
    %83 = vector.load %arg11[%c0_35, %c0_36, %c0_37] : memref<1x1x32xf32, #tpu.memory_space<vmem>>, vector<1x1x32xf32>
    %84 = vector.shape_cast %83 : vector<1x1x32xf32> to vector<1x32xf32>
    %85 = vector.broadcast %84 : vector<1x32xf32> to vector<16x32xf32>
    %86 = arith.addf %82, %85 : vector<16x32xf32>
    %87 = arith.truncf %86 : vector<16x32xf32> to vector<16x32xbf16>
    %c0_38 = arith.constant 0 : index
    %c0_39 = arith.constant 0 : index
    %c0_40 = arith.constant 0 : index
    %88 = vector.load %arg12[%c0_38, %c0_39, %c0_40] : memref<1x32x64xbf16, #tpu.memory_space<vmem>>, vector<1x32x64xbf16>
    %89 = vector.shape_cast %88 : vector<1x32x64xbf16> to vector<32x64xbf16>
    %cst_41 = arith.constant dense<0.000000e+00> : vector<16x64xf32>
    %90 = tpu.matmul %87, %89, %cst_41 {dimension_numbers = #tpu.dot_dimension_numbers<[1], [0], [0], [1], [0, 0, 1, 1], [], []>} : vector<16x32xbf16>, vector<32x64xbf16>, vector<16x64xf32> -> vector<16x64xf32>
    %c0_42 = arith.constant 0 : index
    %c0_43 = arith.constant 0 : index
    %c0_44 = arith.constant 0 : index
    %91 = vector.load %arg13[%c0_42, %c0_43, %c0_44] : memref<1x1x64xf32, #tpu.memory_space<vmem>>, vector<1x1x64xf32>
    %92 = vector.shape_cast %91 : vector<1x1x64xf32> to vector<1x64xf32>
    %93 = vector.broadcast %92 : vector<1x64xf32> to vector<16x64xf32>
    %94 = arith.addf %90, %93 : vector<16x64xf32>
    %cst_45 = arith.constant 0.000000e+00 : f32
    %95 = vector.broadcast %cst_45 : f32 to vector<16x64xf32>
    %96 = arith.maximumf %94, %95 : vector<16x64xf32>
    %97 = arith.truncf %96 : vector<16x64xf32> to vector<16x64xbf16>
    %c0_46 = arith.constant 0 : index
    %c0_47 = arith.constant 0 : index
    %c0_48 = arith.constant 0 : index
    %98 = vector.load %arg14[%c0_46, %c0_47, %c0_48] : memref<1x64x32xbf16, #tpu.memory_space<vmem>>, vector<1x64x32xbf16>
    %99 = vector.shape_cast %98 : vector<1x64x32xbf16> to vector<64x32xbf16>
    %cst_49 = arith.constant dense<0.000000e+00> : vector<16x32xf32>
    %100 = tpu.matmul %97, %99, %cst_49 {dimension_numbers = #tpu.dot_dimension_numbers<[1], [0], [0], [1], [0, 0, 1, 1], [], []>} : vector<16x64xbf16>, vector<64x32xbf16>, vector<16x32xf32> -> vector<16x32xf32>
    %c0_50 = arith.constant 0 : index
    %c0_51 = arith.constant 0 : index
    %c0_52 = arith.constant 0 : index
    %101 = vector.load %arg15[%c0_50, %c0_51, %c0_52] : memref<1x1x32xf32, #tpu.memory_space<vmem>>, vector<1x1x32xf32>
    %102 = vector.shape_cast %101 : vector<1x1x32xf32> to vector<1x32xf32>
    %103 = vector.broadcast %102 : vector<1x32xf32> to vector<16x32xf32>
    %104 = arith.addf %100, %103 : vector<16x32xf32>
    %105 = arith.addf %104, %86 : vector<16x32xf32>
    %cst_53 = arith.constant dense<0.000000e+00> : vector<16xf32>
    %106 = vector.multi_reduction <add>, %105, %cst_53 [1] : vector<16x32xf32> to vector<16xf32>
    %107 = vector.shape_cast %106 : vector<16xf32> to vector<16x1xf32>
    %cst_54 = arith.constant 3.200000e+01 : f32
    %108 = vector.broadcast %cst_54 : f32 to vector<16x1xf32>
    %109 = arith.divf %107, %108 : vector<16x1xf32>
    %110 = vector.broadcast %109 : vector<16x1xf32> to vector<16x32xf32>
    %111 = arith.subf %105, %110 : vector<16x32xf32>
    %112 = arith.mulf %111, %111 : vector<16x32xf32>
    %cst_55 = arith.constant dense<0.000000e+00> : vector<16xf32>
    %113 = vector.multi_reduction <add>, %112, %cst_55 [1] : vector<16x32xf32> to vector<16xf32>
    %114 = vector.shape_cast %113 : vector<16xf32> to vector<16x1xf32>
    %cst_56 = arith.constant 3.200000e+01 : f32
    %115 = vector.broadcast %cst_56 : f32 to vector<16x1xf32>
    %116 = arith.divf %114, %115 : vector<16x1xf32>
    %117 = vector.broadcast %109 : vector<16x1xf32> to vector<16x32xf32>
    %118 = arith.subf %105, %117 : vector<16x32xf32>
    %cst_57 = arith.constant 9.99999997E-7 : f32
    %119 = vector.broadcast %cst_57 : f32 to vector<16x1xf32>
    %120 = arith.addf %116, %119 : vector<16x1xf32>
    %121 = math.rsqrt %120 : vector<16x1xf32>
    %122 = vector.broadcast %121 : vector<16x1xf32> to vector<16x32xf32>
    %123 = arith.mulf %118, %122 : vector<16x32xf32>
    %c0_58 = arith.constant 0 : index
    %c0_59 = arith.constant 0 : index
    %c0_60 = arith.constant 0 : index
    %124 = vector.load %arg16[%c0_58, %c0_59, %c0_60] : memref<1x1x32xf32, #tpu.memory_space<vmem>>, vector<1x1x32xf32>
    %125 = vector.shape_cast %124 : vector<1x1x32xf32> to vector<1x32xf32>
    %126 = vector.broadcast %125 : vector<1x32xf32> to vector<16x32xf32>
    %127 = arith.mulf %123, %126 : vector<16x32xf32>
    %c0_61 = arith.constant 0 : index
    %c0_62 = arith.constant 0 : index
    %c0_63 = arith.constant 0 : index
    %128 = vector.load %arg17[%c0_61, %c0_62, %c0_63] : memref<1x1x32xf32, #tpu.memory_space<vmem>>, vector<1x1x32xf32>
    %129 = vector.shape_cast %128 : vector<1x1x32xf32> to vector<1x32xf32>
    %130 = vector.broadcast %129 : vector<1x32xf32> to vector<16x32xf32>
    %131 = arith.addf %127, %130 : vector<16x32xf32>
    %c0_64 = arith.constant 0 : index
    %c0_65 = arith.constant 0 : index
    %132 = vector.load %arg20[%c0_64, %c0_65] : memref<16x32xf32, #tpu.memory_space<vmem>>, vector<16x32xf32>
    tpu.vector_store %arg20[%c0_64, %c0_65], %131 {strides = array<i32>} : memref<16x32xf32, #tpu.memory_space<vmem>>, vector<16x32xf32>,
    %133 = vector.shape_cast %131 : vector<16x32xf32> to vector<2x8x32xf32>
    %c0_66 = arith.constant 0 : index
    %c0_67 = arith.constant 0 : index
    %c0_68 = arith.constant 0 : index
    %134 = vector.load %arg18[%c0_66, %c0_67, %c0_68] : memref<2x8x32xf32, #tpu.memory_space<vmem>>, vector<2x8x32xf32>
    tpu.vector_store %arg18[%c0_66, %c0_67, %c0_68], %133 {strides = array<i32>} : memref<2x8x32xf32, #tpu.memory_space<vmem>>, vector<2x8x32xf32>,
    return
  }
  func.func @transform_0(%arg0: i32, %arg1: i32) -> (i32, i32, i32) {
    %c0_i32 = arith.constant 0 : i32
    %c0_i32_0 = arith.constant 0 : i32
    %c0_i32_1 = arith.constant 0 : i32
    return %arg0, %c0_i32, %c0_i32_0 : i32, i32, i32
  }
  func.func @transform_1(%arg0: i32, %arg1: i32) -> (i32, i32, i32) {
    %c0_i32 = arith.constant 0 : i32
    %c0_i32_0 = arith.constant 0 : i32
    %c0_i32_1 = arith.constant 0 : i32
    return %arg0, %c0_i32, %c0_i32_0 : i32, i32, i32
  }
  func.func @transform_2(%arg0: i32, %arg1: i32) -> (i32, i32) {
    %c0_i32 = arith.constant 0 : i32
    %c0_i32_0 = arith.constant 0 : i32
    %c0_i32_1 = arith.constant 0 : i32
    return %c0_i32, %c0_i32_0 : i32, i32
  }
  func.func @transform_3(%arg0: i32, %arg1: i32) -> (i32, i32) {
    %c0_i32 = arith.constant 0 : i32
    %c0_i32_0 = arith.constant 0 : i32
    %c0_i32_1 = arith.constant 0 : i32
    return %c0_i32, %c0_i32_0 : i32, i32
  }
  func.func @transform_4(%arg0: i32, %arg1: i32) -> (i32, i32, i32) {
    %c0_i32 = arith.constant 0 : i32
    %c0_i32_0 = arith.constant 0 : i32
    %c0_i32_1 = arith.constant 0 : i32
    return %arg1, %c0_i32, %c0_i32_0 : i32, i32, i32
  }
  func.func @transform_5(%arg0: i32, %arg1: i32) -> (i32, i32, i32) {
    %c0_i32 = arith.constant 0 : i32
    %c0_i32_0 = arith.constant 0 : i32
    %c0_i32_1 = arith.constant 0 : i32
    return %arg1, %c0_i32, %c0_i32_0 : i32, i32, i32
  }
  func.func @transform_6(%arg0: i32, %arg1: i32) -> (i32, i32, i32) {
    %c0_i32 = arith.constant 0 : i32
    %c0_i32_0 = arith.constant 0 : i32
    %c0_i32_1 = arith.constant 0 : i32
    return %arg1, %c0_i32, %c0_i32_0 : i32, i32, i32
  }
  func.func @transform_7(%arg0: i32, %arg1: i32) -> (i32, i32, i32) {
    %c0_i32 = arith.constant 0 : i32
    %c0_i32_0 = arith.constant 0 : i32
    %c0_i32_1 = arith.constant 0 : i32
    return %arg1, %c0_i32, %c0_i32_0 : i32, i32, i32
  }
  func.func @transform_8(%arg0: i32, %arg1: i32) -> (i32, i32, i32) {
    %c0_i32 = arith.constant 0 : i32
    %c0_i32_0 = arith.constant 0 : i32
    %c0_i32_1 = arith.constant 0 : i32
    return %arg1, %c0_i32, %c0_i32_0 : i32, i32, i32
  }
  func.func @transform_9(%arg0: i32, %arg1: i32) -> (i32, i32, i32) {
    %c0_i32 = arith.constant 0 : i32
    %c0_i32_0 = arith.constant 0 : i32
    %c0_i32_1 = arith.constant 0 : i32
    return %arg1, %c0_i32, %c0_i32_0 : i32, i32, i32
  }
  func.func @transform_10(%arg0: i32, %arg1: i32) -> (i32, i32, i32) {
    %c0_i32 = arith.constant 0 : i32
    %c0_i32_0 = arith.constant 0 : i32
    %c0_i32_1 = arith.constant 0 : i32
    return %arg1, %c0_i32, %c0_i32_0 : i32, i32, i32
  }
  func.func @transform_11(%arg0: i32, %arg1: i32) -> (i32, i32, i32) {
    %c0_i32 = arith.constant 0 : i32
    %c0_i32_0 = arith.constant 0 : i32
    %c0_i32_1 = arith.constant 0 : i32
    return %arg1, %c0_i32, %c0_i32_0 : i32, i32, i32
  }
  func.func @transform_12(%arg0: i32, %arg1: i32) -> (i32, i32, i32) {
    %c0_i32 = arith.constant 0 : i32
    %c0_i32_0 = arith.constant 0 : i32
    %c0_i32_1 = arith.constant 0 : i32
    return %arg1, %c0_i32, %c0_i32_0 : i32, i32, i32
  }
  func.func @transform_13(%arg0: i32, %arg1: i32) -> (i32, i32, i32) {
    %c0_i32 = arith.constant 0 : i32
    %c0_i32_0 = arith.constant 0 : i32
    %c0_i32_1 = arith.constant 0 : i32
    return %arg1, %c0_i32, %c0_i32_0 : i32, i32, i32
  }
  func.func @transform_14(%arg0: i32, %arg1: i32) -> (i32, i32, i32) {
    %c0_i32 = arith.constant 0 : i32
    %c0_i32_0 = arith.constant 0 : i32
    %c0_i32_1 = arith.constant 0 : i32
    return %arg1, %c0_i32, %c0_i32_0 : i32, i32, i32
  }
  func.func @transform_15(%arg0: i32, %arg1: i32) -> (i32, i32, i32) {
    %c0_i32 = arith.constant 0 : i32
    %c0_i32_0 = arith.constant 0 : i32
    %c0_i32_1 = arith.constant 0 : i32
    return %arg1, %c0_i32, %c0_i32_0 : i32, i32, i32
  }
  func.func @transform_16(%arg0: i32, %arg1: i32) -> (i32, i32, i32) {
    %c0_i32 = arith.constant 0 : i32
    %c0_i32_0 = arith.constant 0 : i32
    %c0_i32_1 = arith.constant 0 : i32
    return %arg0, %c0_i32, %c0_i32_0 : i32, i32, i32
  }
  func.func @transform_17(%arg0: i32, %arg1: i32) -> (i32, i32, i32, i32) {
    %c1_i32 = arith.constant 1 : i32
    %0 = arith.muli %arg1, %c1_i32 : i32
    %1 = arith.addi %0, %arg0 : i32
    %c0_i32 = arith.constant 0 : i32
    %c0_i32_0 = arith.constant 0 : i32
    %c0_i32_1 = arith.constant 0 : i32
    %c0_i32_2 = arith.constant 0 : i32
    return %1, %c0_i32, %c0_i32_0, %c0_i32_1 : i32, i32, i32, i32
  }
}

</mosaic_0001>

<llo_original>
// kernel: tpu_custom_call.1
$region0: #{tpu_custom_call.1}
  #allocation0 [shape = 'u32[]', space=smem, size = 0x4, offset = 0x4, fixed_abs, tag = 'smem constant byte address 0x4 - core index']
  #allocation1 [shape = 'u32[72,128]{1,0:T(1,128)}', space=vmem, size = 0x9000, scoped, tag = 'internal scratch']
  #allocation2 [shape = 'f32[16,32]{1,0:T(8,128)}', space=vmem, size = 0x2000, scoped, tag = 'scratch operand']
  %s0 = inlined_call_operand.hbm [shape: f32[2,8,32], index: 0, kind: input, shape index: {}]
  %s1 = inlined_call_operand.hbm [shape: f32[2,1,8], index: 1, kind: input, shape index: {}]
  %s2 = inlined_call_operand.hbm [shape: f32[8,32], index: 2, kind: input, shape index: {}]
  %s3 = inlined_call_operand.hbm [shape: f32[8,32], index: 3, kind: input, shape index: {}]
  %s4 = inlined_call_operand.vmem [shape: bf16[2,32,96], index: 4, kind: input, shape index: {}]
  %s5 = inlined_call_operand.vmem [shape: f32[2,1,96], index: 5, kind: input, shape index: {}]
  %s6 = inlined_call_operand.vmem [shape: bf16[2,32,32], index: 6, kind: input, shape index: {}]
  %s7 = inlined_call_operand.vmem [shape: f32[2,1,32], index: 7, kind: input, shape index: {}]
  %s8 = inlined_call_operand.vmem [shape: f32[2,1,32], index: 8, kind: input, shape index: {}]
  %s9 = inlined_call_operand.hbm [shape: f32[2,1,32], index: 9, kind: input, shape index: {}]
  %s10 = inlined_call_operand.vmem [shape: bf16[2,32,64], index: 10, kind: input, shape index: {}]
  %s11 = inlined_call_operand.vmem [shape: f32[2,1,64], index: 11, kind: input, shape index: {}]
  %s12 = inlined_call_operand.vmem [shape: bf16[2,64,32], index: 12, kind: input, shape index: {}]
  %s13 = inlined_call_operand.vmem [shape: f32[2,1,32], index: 13, kind: input, shape index: {}]
  %s14 = inlined_call_operand.vmem [shape: f32[2,1,32], index: 14, kind: input, shape index: {}]
  %s15 = inlined_call_operand.hbm [shape: f32[2,1,32], index: 15, kind: input, shape index: {}]
  %s16 = inlined_call_operand.hbm [shape: f32[2,8,32], index: 16, kind: output, shape index: {0}]
  %s17 = inlined_call_operand.hbm [shape: f32[4,4,8,8], index: 17, kind: output, shape index: {1}]
  %18 = xla_tuple %s16, %s17
  %s19 = sld [smem:[#allocation0]]
  $region133: #{tpu_custom_call.1} parent=0
    _
  %s21 = ssub.s32 1, %s19
  %s22 = scalar_select 0, %s21, %s19
  $region1: #{tpu_custom_call.1} parent=0
    #allocation3 [shape = 'u8[8192]{0}', space=vmem, size = 0x2000, scoped, tag = 'input window, operand 0, single buffered']
    #allocation4 [shape = 's32[2]{0}', space=sflag, size = 0x8, scoped, tag = 'scoped memory for tpu_custom_call.1']
    #allocation5 [shape = 's32[2]{0}', space=sflag, size = 0x8, scoped, tag = 'scoped memory for tpu_custom_call.1']
    #allocation6 [shape = 'u8[1024]{0}', space=vmem, size = 0x400, scoped, tag = 'input window, operand 1, single buffered']
    #allocation7 [shape = 's32[1]{0}', space=sflag, size = 0x4, scoped, tag = 'scoped memory for tpu_custom_call.1']
    #allocation8 [shape = 'u8[4096]{0}', space=vmem, size = 0x1000, scoped, tag = 'input window, operand 2, single buffered']
    #allocation9 [shape = 'u8[4096]{0}', space=vmem, size = 0x1000, scoped, tag = 'input window, operand 3, single buffered']
    #allocation10 [shape = 's32[1]{0}', space=sflag, size = 0x4, scoped, tag = 'scoped memory for tpu_custom_call.1']
    #allocation11 [shape = 'u8[1024]{0}', space=vmem, size = 0x400, scoped, tag = 'input window, operand 9']
    #allocation12 [shape = 'u8[1024]{0}', space=vmem, size = 0x400, scoped, tag = 'input window, operand 15']
    #allocation13 [shape = 'u8[8192]{0}', space=vmem, size = 0x2000, scoped, tag = 'output window, operand 0, single buffered']
    #allocation14 [shape = 'u8[65536]{0}', space=vmem, size = 0x10000, scoped, tag = 'output window, operand 1']
    #allocation15 [shape = 's32[2]{0}', space=sflag, size = 0x8, scoped, tag = 'scoped memory for tpu_custom_call.1']
    %23 = vsyncpa [#allocation4], 0
    %24 = vsyncpa [#allocation7], 0
    %25 = vsyncpa [#allocation10], 0
    %26 = vsyncpa [#allocation5], 0
    %27 = vsyncpa [#allocation15], 0
    %s28 = scalar_lea.sflag [#allocation15], 1
    %29 = vsyncpa %s28, 0
    loop: start=0, step=1, limit=4
    $region2: #{tpu_custom_call.1} parent=1 // loop_pre_header
      _
    $region3: #{tpu_custom_call.1} parent=1 // loop_header
      %s31 = sphi 0, %s35
      %p32 = scmp.ge.s32.totalorder %s31, 4
      %s38 = sphi 0, %s50
      %s39 = sphi 0, %s46
      %s40 = sphi 0, %s38
      %s41 = sphi 0, %s39
      %s42 = sphi 0, %s40
      %s43 = sphi 0, %s41
      %s53 = sphi 0, %s55
      %s56 = sphi 0, %s53
      %s57 = sphi 0, %s56
      %s73 = sphi 0, %s57
      %s79 = sphi 0, %s81
      %s82 = sphi 0, %s79
      %s83 = sphi 0, %s82
      %s99 = sphi 0, %s83
      %s103 = sphi 0, %s103
      %s105 = sphi 0, %s103
      %s106 = sphi 0, %s105
      %s120 = sphi 0, %s106
      %s124 = sphi 0, %s124
      %s126 = sphi 0, %s124
      %s127 = sphi 0, %s126
      %s141 = sphi 0, %s127
      %s147 = sphi 0, %s149
      %s150 = sphi 0, %s147
      %s151 = sphi 0, %s150
      %s167 = sphi 0, %s151
      %s173 = sphi 0, %s175
      %s176 = sphi 0, %s173
      %s177 = sphi 0, %s176
      %s193 = sphi 0, %s177
      %s199 = sphi 0, %s201
      %s202 = sphi 0, %s199
      %s203 = sphi 0, %s202
      %s219 = sphi 0, %s203
      %s225 = sphi 0, %s227
      %s228 = sphi 0, %s225
      %s229 = sphi 0, %s228
      %s245 = sphi 0, %s229
      %s251 = sphi 0, %s253
      %s254 = sphi 0, %s251
      %s255 = sphi 0, %s254
      %s271 = sphi 0, %s255
      %s277 = sphi 0, %s279
      %s280 = sphi 0, %s277
      %s281 = sphi 0, %s280
      %s297 = sphi 0, %s281
      %s303 = sphi 0, %s305
      %s306 = sphi 0, %s303
      %s307 = sphi 0, %s306
      %s323 = sphi 0, %s307
      %s329 = sphi 0, %s331
      %s332 = sphi 0, %s329
      %s333 = sphi 0, %s332
      %s349 = sphi 0, %s333
      %s355 = sphi 0, %s357
      %s358 = sphi 0, %s355
      %s359 = sphi 0, %s358
      %s375 = sphi 0, %s359
      %s381 = sphi 0, %s383
      %s384 = sphi 0, %s381
      %s385 = sphi 0, %s384
      %s401 = sphi 0, %s385
      %s407 = sphi 0, %s409
      %s410 = sphi 0, %s407
      %s411 = sphi 0, %s410
      %s427 = sphi 0, %s411
      %s433 = sphi 0, %s435
      %s436 = sphi 0, %s433
      %s437 = sphi 0, %s436
      %s453 = sphi 0, %s437
      %s459 = sphi 0, %s461
      %s462 = sphi 0, %s459
      %s463 = sphi 0, %s462
      %s479 = sphi 0, %s463
      %s487 = sphi 0, %s489
      %s490 = sphi 0, %s487
      %s491 = sphi 0, %s490
      %s507 = sphi 0, %s491
    $region4: #{tpu_custom_call.1} parent=1 // loop_header_branch
      %34 = sbr.rel (%p32) target = $region8
    $region5: #{tpu_custom_call.1} parent=1 // loop_body
      %s36 = ssub.s32 %s31, 1
      %s37 = ssub.s32 %s31, 2
      %s44 = sadd.s32 1, %s39
      %p45 = scmp.ge.s32.totalorder %s44, 2
      %s46 = scalar_select %p45, 0, %s44
      %s47 = sadd.s32 1, %s38
      %s48 = scalar_select %p45, %s47, %s38
      %p49 = scmp.ge.s32.totalorder %s48, 1
      %s50 = scalar_select %p49, 0, %s48
      %s51 = ssub.s32 %s38, %s50
      %p52 = scmp.eq.s32.totalorder %s51, 0
      %s54 = sadd.s32 %s53, 1
      %s55 = scalar_select %p52, %s53, %s54
      %p58 = pneg %p52
      %p59 = scmp.eq.s32.totalorder %s31, 1
      %p60 = por %p58, %p59
      %p61 = scmp.ne.s32.totalorder %s53, %s56
      %p62 = scmp.eq.s32.totalorder %s31, 0
      %p63 = por %p61, %p62
      %p64 = scmp.ne.s32.totalorder %s53, %s56
      %p65 = scmp.eq.s32.totalorder %s36, 1
      %p66 = por %p64, %p65
      %p67 = scmp.ne.s32.totalorder %s56, %s57
      %p68 = scmp.eq.s32.totalorder %s36, 0
      %p69 = por %p67, %p68
      %p70 = scmp.ne.s32.totalorder %s56, %s57
      %p71 = scmp.eq.s32.totalorder %s37, 1
      %p72 = por %p70, %p71
      %p74 = scmp.ne.s32.totalorder %s57, %s73
      %p75 = scmp.eq.s32.totalorder %s37, 0
      %p76 = por %p74, %p75
      %s77 = ssub.s32 %s38, %s50
      %p78 = scmp.eq.s32.totalorder %s77, 0
      %s80 = sadd.s32 %s79, 1
      %s81 = scalar_select %p78, %s79, %s80
      %p84 = pneg %p78
      %p85 = scmp.eq.s32.totalorder %s31, 1
      %p86 = por %p84, %p85
      %p87 = scmp.ne.s32.totalorder %s79, %s82
      %p88 = scmp.eq.s32.totalorder %s31, 0
      %p89 = por %p87, %p88
      %p90 = scmp.ne.s32.totalorder %s79, %s82
      %p91 = scmp.eq.s32.totalorder %s36, 1
      %p92 = por %p90, %p91
      %p93 = scmp.ne.s32.totalorder %s82, %s83
      %p94 = scmp.eq.s32.totalorder %s36, 0
      %p95 = por %p93, %p94
      %p96 = scmp.ne.s32.totalorder %s82, %s83
      %p97 = scmp.eq.s32.totalorder %s37, 1
      %p98 = por %p96, %p97
      %p100 = scmp.ne.s32.totalorder %s83, %s99
      %p101 = scmp.eq.s32.totalorder %s37, 0
      %p102 = por %p100, %p101
      %s104 = sadd.s32 %s103, 1
      %p107 = scmp.eq.s32.totalorder %s31, 1
      %p108 = scmp.ne.s32.totalorder %s103, %s105
      %p109 = scmp.eq.s32.totalorder %s31, 0
      %p110 = por %p108, %p109
      %p111 = scmp.ne.s32.totalorder %s103, %s105
      %p112 = scmp.eq.s32.totalorder %s36, 1
      %p113 = por %p111, %p112
      %p114 = scmp.ne.s32.totalorder %s105, %s106
      %p115 = scmp.eq.s32.totalorder %s36, 0
      %p116 = por %p114, %p115
      %p117 = scmp.ne.s32.totalorder %s105, %s106
      %p118 = scmp.eq.s32.totalorder %s37, 1
      %p119 = por %p117, %p118
      %p121 = scmp.ne.s32.totalorder %s106, %s120
      %p122 = scmp.eq.s32.totalorder %s37, 0
      %p123 = por %p121, %p122
      %s125 = sadd.s32 %s124, 1
      %p128 = scmp.eq.s32.totalorder %s31, 1
      %p129 = scmp.ne.s32.totalorder %s124, %s126
      %p130 = scmp.eq.s32.totalorder %s31, 0
      %p131 = por %p129, %p130
      %p132 = scmp.ne.s32.totalorder %s124, %s126
      %p133 = scmp.eq.s32.totalorder %s36, 1
      %p134 = por %p132, %p133
      %p135 = scmp.ne.s32.totalorder %s126, %s127
      %p136 = scmp.eq.s32.totalorder %s36, 0
      %p137 = por %p135, %p136
      %p138 = scmp.ne.s32.totalorder %s126, %s127
      %p139 = scmp.eq.s32.totalorder %s37, 1
      %p140 = por %p138, %p139
      %p142 = scmp.ne.s32.totalorder %s127, %s141
      %p143 = scmp.eq.s32.totalorder %s37, 0
      %p144 = por %p142, %p143
      %s145 = ssub.s32 %s39, %s46
      %p146 = scmp.eq.s32.totalorder %s145, 0
      %s148 = sadd.s32 %s147, 1
      %s149 = scalar_select %p146, %s147, %s148
      %p152 = pneg %p146
      %p153 = scmp.eq.s32.totalorder %s31, 1
      %p154 = por %p152, %p153
      %p155 = scmp.ne.s32.totalorder %s147, %s150
      %p156 = scmp.eq.s32.totalorder %s31, 0
      %p157 = por %p155, %p156
      %p158 = scmp.ne.s32.totalorder %s147, %s150
      %p159 = scmp.eq.s32.totalorder %s36, 1
      %p160 = por %p158, %p159
      %p161 = scmp.ne.s32.totalorder %s150, %s151
      %p162 = scmp.eq.s32.totalorder %s36, 0
      %p163 = por %p161, %p162
      %p164 = scmp.ne.s32.totalorder %s150, %s151
      %p165 = scmp.eq.s32.totalorder %s37, 1
      %p166 = por %p164, %p165
      %p168 = scmp.ne.s32.totalorder %s151, %s167
      %p169 = scmp.eq.s32.totalorder %s37, 0
      %p170 = por %p168, %p169
      %s171 = ssub.s32 %s39, %s46
      %p172 = scmp.eq.s32.totalorder %s171, 0
      %s174 = sadd.s32 %s173, 1
      %s175 = scalar_select %p172, %s173, %s174
      %p178 = pneg %p172
      %p179 = scmp.eq.s32.totalorder %s31, 1
      %p180 = por %p178, %p179
      %p181 = scmp.ne.s32.totalorder %s173, %s176
      %p182 = scmp.eq.s32.totalorder %s31, 0
      %p183 = por %p181, %p182
      %p184 = scmp.ne.s32.totalorder %s173, %s176
      %p185 = scmp.eq.s32.totalorder %s36, 1
      %p186 = por %p184, %p185
      %p187 = scmp.ne.s32.totalorder %s176, %s177
      %p188 = scmp.eq.s32.totalorder %s36, 0
      %p189 = por %p187, %p188
      %p190 = scmp.ne.s32.totalorder %s176, %s177
      %p191 = scmp.eq.s32.totalorder %s37, 1
      %p192 = por %p190, %p191
      %p194 = scmp.ne.s32.totalorder %s177, %s193
      %p195 = scmp.eq.s32.totalorder %s37, 0
      %p196 = por %p194, %p195
      %s197 = ssub.s32 %s39, %s46
      %p198 = scmp.eq.s32.totalorder %s197, 0
      %s200 = sadd.s32 %s199, 1
      %s201 = scalar_select %p198, %s199, %s200
      %p204 = pneg %p198
      %p205 = scmp.eq.s32.totalorder %s31, 1
      %p206 = por %p204, %p205
      %p207 = scmp.ne.s32.totalorder %s199, %s202
      %p208 = scmp.eq.s32.totalorder %s31, 0
      %p209 = por %p207, %p208
      %p210 = scmp.ne.s32.totalorder %s199, %s202
      %p211 = scmp.eq.s32.totalorder %s36, 1
      %p212 = por %p210, %p211
      %p213 = scmp.ne.s32.totalorder %s202, %s203
      %p214 = scmp.eq.s32.totalorder %s36, 0
      %p215 = por %p213, %p214
      %p216 = scmp.ne.s32.totalorder %s202, %s203
      %p217 = scmp.eq.s32.totalorder %s37, 1
      %p218 = por %p216, %p217
      %p220 = scmp.ne.s32.totalorder %s203, %s219
      %p221 = scmp.eq.s32.totalorder %s37, 0
      %p222 = por %p220, %p221
      %s223 = ssub.s32 %s39, %s46
      %p224 = scmp.eq.s32.totalorder %s223, 0
      %s226 = sadd.s32 %s225, 1
      %s227 = scalar_select %p224, %s225, %s226
      %p230 = pneg %p224
      %p231 = scmp.eq.s32.totalorder %s31, 1
      %p232 = por %p230, %p231
      %p233 = scmp.ne.s32.totalorder %s225, %s228
      %p234 = scmp.eq.s32.totalorder %s31, 0
      %p235 = por %p233, %p234
      %p236 = scmp.ne.s32.totalorder %s225, %s228
      %p237 = scmp.eq.s32.totalorder %s36, 1
      %p238 = por %p236, %p237
      %p239 = scmp.ne.s32.totalorder %s228, %s229
      %p240 = scmp.eq.s32.totalorder %s36, 0
      %p241 = por %p239, %p240
      %p242 = scmp.ne.s32.totalorder %s228, %s229
      %p243 = scmp.eq.s32.totalorder %s37, 1
      %p244 = por %p242, %p243
      %p246 = scmp.ne.s32.totalorder %s229, %s245
      %p247 = scmp.eq.s32.totalorder %s37, 0
      %p248 = por %p246, %p247
      %s249 = ssub.s32 %s39, %s46
      %p250 = scmp.eq.s32.totalorder %s249, 0
      %s252 = sadd.s32 %s251, 1
      %s253 = scalar_select %p250, %s251, %s252
      %p256 = pneg %p250
      %p257 = scmp.eq.s32.totalorder %s31, 1
      %p258 = por %p256, %p257
      %p259 = scmp.ne.s32.totalorder %s251, %s254
      %p260 = scmp.eq.s32.totalorder %s31, 0
      %p261 = por %p259, %p260
      %p262 = scmp.ne.s32.totalorder %s251, %s254
      %p263 = scmp.eq.s32.totalorder %s36, 1
      %p264 = por %p262, %p263
      %p265 = scmp.ne.s32.totalorder %s254, %s255
      %p266 = scmp.eq.s32.totalorder %s36, 0
      %p267 = por %p265, %p266
      %p268 = scmp.ne.s32.totalorder %s254, %s255
      %p269 = scmp.eq.s32.totalorder %s37, 1
      %p270 = por %p268, %p269
      %p272 = scmp.ne.s32.totalorder %s255, %s271
      %p273 = scmp.eq.s32.totalorder %s37, 0
      %p274 = por %p272, %p273
      %s275 = ssub.s32 %s39, %s46
      %p276 = scmp.eq.s32.totalorder %s275, 0
      %s278 = sadd.s32 %s277, 1
      %s279 = scalar_select %p276, %s277, %s278
      %p282 = pneg %p276
      %p283 = scmp.eq.s32.totalorder %s31, 1
      %p284 = por %p282, %p283
      %p285 = scmp.ne.s32.totalorder %s277, %s280
      %p286 = scmp.eq.s32.totalorder %s31, 0
      %p287 = por %p285, %p286
      %p288 = scmp.ne.s32.totalorder %s277, %s280
      %p289 = scmp.eq.s32.totalorder %s36, 1
      %p290 = por %p288, %p289
      %p291 = scmp.ne.s32.totalorder %s280, %s281
      %p292 = scmp.eq.s32.totalorder %s36, 0
      %p293 = por %p291, %p292
      %p294 = scmp.ne.s32.totalorder %s280, %s281
      %p295 = scmp.eq.s32.totalorder %s37, 1
      %p296 = por %p294, %p295
      %p298 = scmp.ne.s32.totalorder %s281, %s297
      %p299 = scmp.eq.s32.totalorder %s37, 0
      %p300 = por %p298, %p299
      %s301 = ssub.s32 %s39, %s46
      %p302 = scmp.eq.s32.totalorder %s301, 0
      %s304 = sadd.s32 %s303, 1
      %s305 = scalar_select %p302, %s303, %s304
      %p308 = pneg %p302
      %p309 = scmp.eq.s32.totalorder %s31, 1
      %p310 = por %p308, %p309
      %p311 = scmp.ne.s32.totalorder %s303, %s306
      %p312 = scmp.eq.s32.totalorder %s31, 0
      %p313 = por %p311, %p312
      %p314 = scmp.ne.s32.totalorder %s303, %s306
      %p315 = scmp.eq.s32.totalorder %s36, 1
      %p316 = por %p314, %p315
      %p317 = scmp.ne.s32.totalorder %s306, %s307
      %p318 = scmp.eq.s32.totalorder %s36, 0
      %p319 = por %p317, %p318
      %p320 = scmp.ne.s32.totalorder %s306, %s307
      %p321 = scmp.eq.s32.totalorder %s37, 1
      %p322 = por %p320, %p321
      %p324 = scmp.ne.s32.totalorder %s307, %s323
      %p325 = scmp.eq.s32.totalorder %s37, 0
      %p326 = por %p324, %p325
      %s327 = ssub.s32 %s39, %s46
      %p328 = scmp.eq.s32.totalorder %s327, 0
      %s330 = sadd.s32 %s329, 1
      %s331 = scalar_select %p328, %s329, %s330
      %p334 = pneg %p328
      %p335 = scmp.eq.s32.totalorder %s31, 1
      %p336 = por %p334, %p335
      %p337 = scmp.ne.s32.totalorder %s329, %s332
      %p338 = scmp.eq.s32.totalorder %s31, 0
      %p339 = por %p337, %p338
      %p340 = scmp.ne.s32.totalorder %s329, %s332
      %p341 = scmp.eq.s32.totalorder %s36, 1
      %p342 = por %p340, %p341
      %p343 = scmp.ne.s32.totalorder %s332, %s333
      %p344 = scmp.eq.s32.totalorder %s36, 0
      %p345 = por %p343, %p344
      %p346 = scmp.ne.s32.totalorder %s332, %s333
      %p347 = scmp.eq.s32.totalorder %s37, 1
      %p348 = por %p346, %p347
      %p350 = scmp.ne.s32.totalorder %s333, %s349
      %p351 = scmp.eq.s32.totalorder %s37, 0
      %p352 = por %p350, %p351
      %s353 = ssub.s32 %s39, %s46
      %p354 = scmp.eq.s32.totalorder %s353, 0
      %s356 = sadd.s32 %s355, 1
      %s357 = scalar_select %p354, %s355, %s356
      %p360 = pneg %p354
      %p361 = scmp.eq.s32.totalorder %s31, 1
      %p362 = por %p360, %p361
      %p363 = scmp.ne.s32.totalorder %s355, %s358
      %p364 = scmp.eq.s32.totalorder %s31, 0
      %p365 = por %p363, %p364
      %p366 = scmp.ne.s32.totalorder %s355, %s358
      %p367 = scmp.eq.s32.totalorder %s36, 1
      %p368 = por %p366, %p367
      %p369 = scmp.ne.s32.totalorder %s358, %s359
      %p370 = scmp.eq.s32.totalorder %s36, 0
      %p371 = por %p369, %p370
      %p372 = scmp.ne.s32.totalorder %s358, %s359
      %p373 = scmp.eq.s32.totalorder %s37, 1
      %p374 = por %p372, %p373
      %p376 = scmp.ne.s32.totalorder %s359, %s375
      %p377 = scmp.eq.s32.totalorder %s37, 0
      %p378 = por %p376, %p377
      %s379 = ssub.s32 %s39, %s46
      %p380 = scmp.eq.s32.totalorder %s379, 0
      %s382 = sadd.s32 %s381, 1
      %s383 = scalar_select %p380, %s381, %s382
      %p386 = pneg %p380
      %p387 = scmp.eq.s32.totalorder %s31, 1
      %p388 = por %p386, %p387
      %p389 = scmp.ne.s32.totalorder %s381, %s384
      %p390 = scmp.eq.s32.totalorder %s31, 0
      %p391 = por %p389, %p390
      %p392 = scmp.ne.s32.totalorder %s381, %s384
      %p393 = scmp.eq.s32.totalorder %s36, 1
      %p394 = por %p392, %p393
      %p395 = scmp.ne.s32.totalorder %s384, %s385
      %p396 = scmp.eq.s32.totalorder %s36, 0
      %p397 = por %p395, %p396
      %p398 = scmp.ne.s32.totalorder %s384, %s385
      %p399 = scmp.eq.s32.totalorder %s37, 1
      %p400 = por %p398, %p399
      %p402 = scmp.ne.s32.totalorder %s385, %s401
      %p403 = scmp.eq.s32.totalorder %s37, 0
      %p404 = por %p402, %p403
      %s405 = ssub.s32 %s39, %s46
      %p406 = scmp.eq.s32.totalorder %s405, 0
      %s408 = sadd.s32 %s407, 1
      %s409 = scalar_select %p406, %s407, %s408
      %p412 = pneg %p406
      %p413 = scmp.eq.s32.totalorder %s31, 1
      %p414 = por %p412, %p413
      %p415 = scmp.ne.s32.totalorder %s407, %s410
      %p416 = scmp.eq.s32.totalorder %s31, 0
      %p417 = por %p415, %p416
      %p418 = scmp.ne.s32.totalorder %s407, %s410
      %p419 = scmp.eq.s32.totalorder %s36, 1
      %p420 = por %p418, %p419
      %p421 = scmp.ne.s32.totalorder %s410, %s411
      %p422 = scmp.eq.s32.totalorder %s36, 0
      %p423 = por %p421, %p422
      %p424 = scmp.ne.s32.totalorder %s410, %s411
      %p425 = scmp.eq.s32.totalorder %s37, 1
      %p426 = por %p424, %p425
      %p428 = scmp.ne.s32.totalorder %s411, %s427
      %p429 = scmp.eq.s32.totalorder %s37, 0
      %p430 = por %p428, %p429
      %s431 = ssub.s32 %s39, %s46
      %p432 = scmp.eq.s32.totalorder %s431, 0
      %s434 = sadd.s32 %s433, 1
      %s435 = scalar_select %p432, %s433, %s434
      %p438 = pneg %p432
      %p439 = scmp.eq.s32.totalorder %s31, 1
      %p440 = por %p438, %p439
      %p441 = scmp.ne.s32.totalorder %s433, %s436
      %p442 = scmp.eq.s32.totalorder %s31, 0
      %p443 = por %p441, %p442
      %p444 = scmp.ne.s32.totalorder %s433, %s436
      %p445 = scmp.eq.s32.totalorder %s36, 1
      %p446 = por %p444, %p445
      %p447 = scmp.ne.s32.totalorder %s436, %s437
      %p448 = scmp.eq.s32.totalorder %s36, 0
      %p449 = por %p447, %p448
      %p450 = scmp.ne.s32.totalorder %s436, %s437
      %p451 = scmp.eq.s32.totalorder %s37, 1
      %p452 = por %p450, %p451
      %p454 = scmp.ne.s32.totalorder %s437, %s453
      %p455 = scmp.eq.s32.totalorder %s37, 0
      %p456 = por %p454, %p455
      %s457 = ssub.s32 %s38, %s50
      %p458 = scmp.eq.s32.totalorder %s457, 0
      %s460 = sadd.s32 %s459, 1
      %s461 = scalar_select %p458, %s459, %s460
      %p464 = pneg %p458
      %p465 = scmp.eq.s32.totalorder %s31, 1
      %p466 = por %p464, %p465
      %p467 = scmp.ne.s32.totalorder %s459, %s462
      %p468 = scmp.eq.s32.totalorder %s31, 0
      %p469 = por %p467, %p468
      %p470 = scmp.ne.s32.totalorder %s459, %s462
      %p471 = scmp.eq.s32.totalorder %s36, 1
      %p472 = por %p470, %p471
      %p473 = scmp.ne.s32.totalorder %s462, %s463
      %p474 = scmp.eq.s32.totalorder %s36, 0
      %p475 = por %p473, %p474
      %p476 = scmp.ne.s32.totalorder %s462, %s463
      %p477 = scmp.eq.s32.totalorder %s37, 1
      %p478 = por %p476, %p477
      %p480 = scmp.ne.s32.totalorder %s463, %s479
      %p481 = scmp.eq.s32.totalorder %s37, 0
      %p482 = por %p480, %p481
      %s483 = sadd.s32 %s39, %s38
      %s484 = sadd.s32 %s46, %s50
      %s485 = ssub.s32 %s483, %s484
      %p486 = scmp.eq.s32.totalorder %s485, 0
      %s488 = sadd.s32 %s487, 1
      %s489 = scalar_select %p486, %s487, %s488
      %p492 = pneg %p486
      %p493 = scmp.eq.s32.totalorder %s31, 1
      %p494 = por %p492, %p493
      %p495 = scmp.ne.s32.totalorder %s487, %s490
      %p496 = scmp.eq.s32.totalorder %s31, 0
      %p497 = por %p495, %p496
      %p498 = scmp.ne.s32.totalorder %s487, %s490
      %p499 = scmp.eq.s32.totalorder %s36, 1
      %p500 = por %p498, %p499
      %p501 = scmp.ne.s32.totalorder %s490, %s491
      %p502 = scmp.eq.s32.totalorder %s36, 0
      %p503 = por %p501, %p502
      %p504 = scmp.ne.s32.totalorder %s490, %s491
      %p505 = scmp.eq.s32.totalorder %s37, 1
      %p506 = por %p504, %p505
      %p508 = scmp.ne.s32.totalorder %s491, %s507
      %p509 = scmp.eq.s32.totalorder %s37, 0
      %p510 = por %p508, %p509
      %p511 = scmp.le.s32.totalorder 1, %s31
      %p512 = scmp.lt.s32.totalorder %s31, 3
      %p513 = pnand %p511, %p512
      %p514 = pneg %p513
      // Predicated region
      $region9: #{tpu_custom_call.1} parent=5 // pred_check
        _
      $region10: #{tpu_custom_call.1} parent=5 // pred_check_branch
        %516 = sbr.rel (%p513) target = $region12
      $region11: #{tpu_custom_call.1} parent=5 // pred_region
        %s517 = ssub.s32 %s31, 1
        // Predicated region
        $region13: #{tpu_custom_call.1} parent=11 // pred_check
          %p518 = pneg %p69
        $region14: #{tpu_custom_call.1} parent=11 // pred_check_branch
          %520 = sbr.rel (%p518) target = $region16
        $region15: #{tpu_custom_call.1} parent=11 // pred_region
          %s521 = smul.u32 2, %s40
          %523 = vsyncadd [#allocation4], 0
          %s524 = smul.addr %s521, 8
          %s525 = scalar_lea.hbm %s0, %s524
          %s526 = sshll.u32 %s525, 4
          %s527 = int_to_ptr.hbm [resolvable:$true] %s526
          %s528 = sshll.u32 [#allocation3], 4
          %s529 = int_to_ptr.vmem [resolvable:$true] %s528
          %534 = dma.hbm_to_vmem [thread:$0]  %s527, 256, %s529, [#allocation4], 128, 128, 8
        $region16: #{tpu_custom_call.1} parent=11 // pred_fallthru
          _
        // Predicated region
        $region17: #{tpu_custom_call.1} parent=11 // pred_check
          %p535 = pneg %p95
        $region18: #{tpu_custom_call.1} parent=11 // pred_check_branch
          %537 = sbr.rel (%p535) target = $region20
        $region19: #{tpu_custom_call.1} parent=11 // pred_region
          %s538 = smul.u32 2, %s40
          %540 = vsyncadd [#allocation7], 0
          %s541 = scalar_lea.hbm %s1, %s538
          %s542 = sshll.u32 %s541, 4
          %s543 = int_to_ptr.hbm [resolvable:$true] %s542
          %s544 = sshll.u32 [#allocation6], 4
          %s545 = int_to_ptr.vmem [resolvable:$true] %s544
          %550 = dma.hbm_to_vmem [thread:$0]  %s543, 32, %s545, [#allocation7], 16, 16, 1
        $region20: #{tpu_custom_call.1} parent=11 // pred_fallthru
          _
        // Predicated region
        $region21: #{tpu_custom_call.1} parent=11 // pred_check
          %p551 = pneg %p116
        $region22: #{tpu_custom_call.1} parent=11 // pred_check_branch
          %553 = sbr.rel (%p551) target = $region24
        $region23: #{tpu_custom_call.1} parent=11 // pred_region
          %555 = vsyncadd [#allocation7], 0
          %s557 = sshll.u32 %s2, 4
          %s558 = int_to_ptr.hbm [resolvable:$true] %s557
          %s559 = sshll.u32 [#allocation8], 4
          %s560 = int_to_ptr.vmem [resolvable:$true] %s559
          %562 = dma.hbm_to_vmem [thread:$0]  %s558, 128, %s560, [#allocation7]
        $region24: #{tpu_custom_call.1} parent=11 // pred_fallthru
          _
        // Predicated region
        $region25: #{tpu_custom_call.1} parent=11 // pred_check
          %p563 = pneg %p137
        $region26: #{tpu_custom_call.1} parent=11 // pred_check_branch
          %565 = sbr.rel (%p563) target = $region28
        $region27: #{tpu_custom_call.1} parent=11 // pred_region
          %567 = vsyncadd [#allocation10], 0
          %s569 = sshll.u32 %s3, 4
          %s570 = int_to_ptr.hbm [resolvable:$true] %s569
          %s571 = sshll.u32 [#allocation9], 4
          %s572 = int_to_ptr.vmem [resolvable:$true] %s571
          %574 = dma.hbm_to_vmem [thread:$0]  %s570, 128, %s572, [#allocation10]
        $region28: #{tpu_custom_call.1} parent=11 // pred_fallthru
          _
      $region12: #{tpu_custom_call.1} parent=5 // pred_fallthru
        _
      %p575 = scmp.lt.s32.totalorder %s31, 2
      // Predicated region
      $region29: #{tpu_custom_call.1} parent=5 // pred_check
        %p576 = pneg %p575
      $region30: #{tpu_custom_call.1} parent=5 // pred_check_branch
        %578 = sbr.rel (%p576) target = $region32
      $region31: #{tpu_custom_call.1} parent=5 // pred_region
        // Predicated region
        $region33: #{tpu_custom_call.1} parent=31 // pred_check
          %p579 = pneg %p157
        $region34: #{tpu_custom_call.1} parent=31 // pred_check_branch
          %581 = sbr.rel (%p579) target = $region36
        $region35: #{tpu_custom_call.1} parent=31 // pred_region
          %p582 = scmp.lt.s32.totalorder %s39, 1
          %s583 = scalar_select %p582, %s39, 1
          %s584 = smul.addr %s583, 4
          %s585 = smul.addr %s584, 4
          %s586 = scalar_lea.vmem %s4, %s585
        $region36: #{tpu_custom_call.1} parent=31 // pred_fallthru
          _
        // Predicated region
        $region37: #{tpu_custom_call.1} parent=31 // pred_check
          %p587 = pneg %p183
        $region38: #{tpu_custom_call.1} parent=31 // pred_check_branch
          %589 = sbr.rel (%p587) target = $region40
        $region39: #{tpu_custom_call.1} parent=31 // pred_region
          %p590 = scmp.lt.s32.totalorder %s39, 1
          %s591 = scalar_select %p590, %s39, 1
          %s592 = scalar_lea.vmem %s5, %s591
        $region40: #{tpu_custom_call.1} parent=31 // pred_fallthru
          _
        // Predicated region
        $region41: #{tpu_custom_call.1} parent=31 // pred_check
          %p593 = pneg %p209
        $region42: #{tpu_custom_call.1} parent=31 // pred_check_branch
          %595 = sbr.rel (%p593) target = $region44
        $region43: #{tpu_custom_call.1} parent=31 // pred_region
          %p596 = scmp.lt.s32.totalorder %s39, 1
          %s597 = scalar_select %p596, %s39, 1
          %s598 = smul.addr %s597, 4
          %s599 = smul.addr %s598, 4
          %s600 = scalar_lea.vmem %s6, %s599
        $region44: #{tpu_custom_call.1} parent=31 // pred_fallthru
          _
        // Predicated region
        $region45: #{tpu_custom_call.1} parent=31 // pred_check
          %p601 = pneg %p235
        $region46: #{tpu_custom_call.1} parent=31 // pred_check_branch
          %603 = sbr.rel (%p601) target = $region48
        $region47: #{tpu_custom_call.1} parent=31 // pred_region
          %p604 = scmp.lt.s32.totalorder %s39, 1
          %s605 = scalar_select %p604, %s39, 1
          %s606 = scalar_lea.vmem %s7, %s605
        $region48: #{tpu_custom_call.1} parent=31 // pred_fallthru
          _
        // Predicated region
        $region49: #{tpu_custom_call.1} parent=31 // pred_check
          %p607 = pneg %p261
        $region50: #{tpu_custom_call.1} parent=31 // pred_check_branch
          %609 = sbr.rel (%p607) target = $region52
        $region51: #{tpu_custom_call.1} parent=31 // pred_region
          %p610 = scmp.lt.s32.totalorder %s39, 1
          %s611 = scalar_select %p610, %s39, 1
          %s612 = scalar_lea.vmem %s8, %s611
        $region52: #{tpu_custom_call.1} parent=31 // pred_fallthru
          _
        // Predicated region
        $region53: #{tpu_custom_call.1} parent=31 // pred_check
          %p613 = pneg %p287
        $region54: #{tpu_custom_call.1} parent=31 // pred_check_branch
          %615 = sbr.rel (%p613) target = $region56
        $region55: #{tpu_custom_call.1} parent=31 // pred_region
          %s616 = sand.u32 %s31, 1
          %s617 = scalar_lea.sflag [#allocation4], %s616
          %s618 = sand.u32 %s277, 1
          %s619 = scalar_lea.vmem [#allocation11], %s618
          %621 = vsyncadd %s617, 0
          %s622 = scalar_lea.hbm %s9, %s39
          %s624 = sshll.u32 %s622, 4
          %s625 = int_to_ptr.hbm [resolvable:$true] %s624
          %s626 = sshll.u32 %s619, 4
          %s627 = int_to_ptr.vmem [resolvable:$true] %s626
          %629 = dma.hbm_to_vmem [thread:$0]  %s625, 16, %s627, %s617
        $region56: #{tpu_custom_call.1} parent=31 // pred_fallthru
          _
        // Predicated region
        $region57: #{tpu_custom_call.1} parent=31 // pred_check
          %p630 = pneg %p313
        $region58: #{tpu_custom_call.1} parent=31 // pred_check_branch
          %632 = sbr.rel (%p630) target = $region60
        $region59: #{tpu_custom_call.1} parent=31 // pred_region
          %p633 = scmp.lt.s32.totalorder %s39, 1
          %s634 = scalar_select %p633, %s39, 1
          %s635 = smul.addr %s634, 4
          %s636 = smul.addr %s635, 4
          %s637 = scalar_lea.vmem %s10, %s636
        $region60: #{tpu_custom_call.1} parent=31 // pred_fallthru
          _
        // Predicated region
        $region61: #{tpu_custom_call.1} parent=31 // pred_check
          %p638 = pneg %p339
        $region62: #{tpu_custom_call.1} parent=31 // pred_check_branch
          %640 = sbr.rel (%p638) target = $region64
        $region63: #{tpu_custom_call.1} parent=31 // pred_region
          %p641 = scmp.lt.s32.totalorder %s39, 1
          %s642 = scalar_select %p641, %s39, 1
          %s643 = scalar_lea.vmem %s11, %s642
        $region64: #{tpu_custom_call.1} parent=31 // pred_fallthru
          _
        // Predicated region
        $region65: #{tpu_custom_call.1} parent=31 // pred_check
          %p644 = pneg %p365
        $region66: #{tpu_custom_call.1} parent=31 // pred_check_branch
          %646 = sbr.rel (%p644) target = $region68
        $region67: #{tpu_custom_call.1} parent=31 // pred_region
          %p647 = scmp.lt.s32.totalorder %s39, 1
          %s648 = scalar_select %p647, %s39, 1
          %s649 = smul.addr %s648, 8
          %s650 = smul.addr %s649, 4
          %s651 = scalar_lea.vmem %s12, %s650
        $region68: #{tpu_custom_call.1} parent=31 // pred_fallthru
          _
        // Predicated region
        $region69: #{tpu_custom_call.1} parent=31 // pred_check
          %p652 = pneg %p391
        $region70: #{tpu_custom_call.1} parent=31 // pred_check_branch
          %654 = sbr.rel (%p652) target = $region72
        $region71: #{tpu_custom_call.1} parent=31 // pred_region
          %p655 = scmp.lt.s32.totalorder %s39, 1
          %s656 = scalar_select %p655, %s39, 1
          %s657 = scalar_lea.vmem %s13, %s656
        $region72: #{tpu_custom_call.1} parent=31 // pred_fallthru
          _
        // Predicated region
        $region73: #{tpu_custom_call.1} parent=31 // pred_check
          %p658 = pneg %p417
        $region74: #{tpu_custom_call.1} parent=31 // pred_check_branch
          %660 = sbr.rel (%p658) target = $region76
        $region75: #{tpu_custom_call.1} parent=31 // pred_region
          %p661 = scmp.lt.s32.totalorder %s39, 1
          %s662 = scalar_select %p661, %s39, 1
          %s663 = scalar_lea.vmem %s14, %s662
        $region76: #{tpu_custom_call.1} parent=31 // pred_fallthru
          _
        // Predicated region
        $region77: #{tpu_custom_call.1} parent=31 // pred_check
          %p664 = pneg %p443
        $region78: #{tpu_custom_call.1} parent=31 // pred_check_branch
          %666 = sbr.rel (%p664) target = $region80
        $region79: #{tpu_custom_call.1} parent=31 // pred_region
          %s667 = sand.u32 %s31, 1
          %s668 = scalar_lea.sflag [#allocation4], %s667
          %s669 = sand.u32 %s433, 1
          %s670 = scalar_lea.vmem [#allocation12], %s669
          %672 = vsyncadd %s668, 0
          %s673 = scalar_lea.hbm %s15, %s39
          %s675 = sshll.u32 %s673, 4
          %s676 = int_to_ptr.hbm [resolvable:$true] %s675
          %s677 = sshll.u32 %s670, 4
          %s678 = int_to_ptr.vmem [resolvable:$true] %s677
          %680 = dma.hbm_to_vmem [thread:$0]  %s676, 16, %s678, %s668
        $region80: #{tpu_custom_call.1} parent=31 // pred_fallthru
          _
      $region32: #{tpu_custom_call.1} parent=5 // pred_fallthru
        _
      %p681 = scmp.le.s32.totalorder 1, %s31
      %p682 = scmp.lt.s32.totalorder %s31, 3
      %p683 = pnand %p681, %p682
      %p684 = pneg %p683
      // Predicated region
      $region81: #{tpu_custom_call.1} parent=5 // pred_check
        _
      $region82: #{tpu_custom_call.1} parent=5 // pred_check_branch
        %686 = sbr.rel (%p683) target = $region84
      $region83: #{tpu_custom_call.1} parent=5 // pred_region
        %s687 = ssub.s32 %s31, 1
        // Predicated region
        $region85: #{tpu_custom_call.1} parent=83 // pred_check
          %p688 = pneg %p69
        $region86: #{tpu_custom_call.1} parent=83 // pred_check_branch
          %690 = sbr.rel (%p688) target = $region88
        $region87: #{tpu_custom_call.1} parent=83 // pred_region
          %692 = dma.done [#allocation4], 256
        $region88: #{tpu_custom_call.1} parent=83 // pred_fallthru
          _
        // Predicated region
        $region89: #{tpu_custom_call.1} parent=83 // pred_check
          %p693 = pneg %p95
        $region90: #{tpu_custom_call.1} parent=83 // pred_check_branch
          %695 = sbr.rel (%p693) target = $region92
        $region91: #{tpu_custom_call.1} parent=83 // pred_region
          %697 = dma.done [#allocation7], 32
        $region92: #{tpu_custom_call.1} parent=83 // pred_fallthru
          _
        // Predicated region
        $region93: #{tpu_custom_call.1} parent=83 // pred_check
          %p698 = pneg %p116
        $region94: #{tpu_custom_call.1} parent=83 // pred_check_branch
          %700 = sbr.rel (%p698) target = $region96
        $region95: #{tpu_custom_call.1} parent=83 // pred_region
          %702 = dma.done [#allocation7], 128
        $region96: #{tpu_custom_call.1} parent=83 // pred_fallthru
          _
        // Predicated region
        $region97: #{tpu_custom_call.1} parent=83 // pred_check
          %p703 = pneg %p137
        $region98: #{tpu_custom_call.1} parent=83 // pred_check_branch
          %705 = sbr.rel (%p703) target = $region100
        $region99: #{tpu_custom_call.1} parent=83 // pred_region
          %707 = dma.done [#allocation10], 128
        $region100: #{tpu_custom_call.1} parent=83 // pred_fallthru
          _
        %s708 = sand.u32 %s36, 1
        %s709 = scalar_lea.sflag [#allocation4], %s708
        %s710 = sand.u32 %s280, 1
        %s711 = scalar_lea.vmem [#allocation11], %s710
        // Predicated region
        $region101: #{tpu_custom_call.1} parent=83 // pred_check
          %p712 = pneg %p293
        $region102: #{tpu_custom_call.1} parent=83 // pred_check_branch
          %714 = sbr.rel (%p712) target = $region104
        $region103: #{tpu_custom_call.1} parent=83 // pred_region
          %716 = dma.done %s709, 16
        $region104: #{tpu_custom_call.1} parent=83 // pred_fallthru
          _
        %s717 = sand.u32 %s36, 1
        %s718 = scalar_lea.sflag [#allocation4], %s717
        %s719 = sand.u32 %s436, 1
        %s720 = scalar_lea.vmem [#allocation12], %s719
        // Predicated region
        $region105: #{tpu_custom_call.1} parent=83 // pred_check
          %p721 = pneg %p449
        $region106: #{tpu_custom_call.1} parent=83 // pred_check_branch
          %723 = sbr.rel (%p721) target = $region108
        $region107: #{tpu_custom_call.1} parent=83 // pred_region
          %725 = dma.done %s718, 16
        $region108: #{tpu_custom_call.1} parent=83 // pred_fallthru
          _
        %p726 = pneg %p69
        %p727 = pneg %p66
        %p728 = pneg %p95
        %p729 = pneg %p92
        %p730 = pneg %p116
        %p731 = pneg %p113
        %p732 = pneg %p137
        %p733 = pneg %p134
        %p734 = scmp.lt.s32.totalorder %s41, 1
        %s735 = scalar_select %p734, %s41, 1
        %s736 = smul.addr %s735, 4
        %s737 = smul.addr %s736, 4
        %s738 = scalar_lea.vmem %s4, %s737
        %p739 = pneg %p163
        %p740 = pneg %p160
        %p741 = scmp.lt.s32.totalorder %s41, 1
        %s742 = scalar_select %p741, %s41, 1
        %s743 = scalar_lea.vmem %s5, %s742
        %p744 = pneg %p189
        %p745 = pneg %p186
        %p746 = scmp.lt.s32.totalorder %s41, 1
        %s747 = scalar_select %p746, %s41, 1
        %s748 = smul.addr %s747, 4
        %s749 = smul.addr %s748, 4
        %s750 = scalar_lea.vmem %s6, %s749
        %p751 = pneg %p215
        %p752 = pneg %p212
        %p753 = scmp.lt.s32.totalorder %s41, 1
        %s754 = scalar_select %p753, %s41, 1
        %s755 = scalar_lea.vmem %s7, %s754
        %p756 = pneg %p241
        %p757 = pneg %p238
        %p758 = scmp.lt.s32.totalorder %s41, 1
        %s759 = scalar_select %p758, %s41, 1
        %s760 = scalar_lea.vmem %s8, %s759
        %p761 = pneg %p267
        %p762 = pneg %p264
        %s763 = sand.u32 %s36, 1
        %s764 = scalar_lea.sflag [#allocation4], %s763
        %s765 = sand.u32 %s280, 1
        %s766 = scalar_lea.vmem [#allocation11], %s765
        %p767 = pneg %p293
        %p768 = pneg %p290
        %p769 = scmp.lt.s32.totalorder %s41, 1
        %s770 = scalar_select %p769, %s41, 1
        %s771 = smul.addr %s770, 4
        %s772 = smul.addr %s771, 4
        %s773 = scalar_lea.vmem %s10, %s772
        %p774 = pneg %p319
        %p775 = pneg %p316
        %p776 = scmp.lt.s32.totalorder %s41, 1
        %s777 = scalar_select %p776, %s41, 1
        %s778 = scalar_lea.vmem %s11, %s777
        %p779 = pneg %p345
        %p780 = pneg %p342
        %p781 = scmp.lt.s32.totalorder %s41, 1
        %s782 = scalar_select %p781, %s41, 1
        %s783 = smul.addr %s782, 8
        %s784 = smul.addr %s783, 4
        %s785 = scalar_lea.vmem %s12, %s784
        %p786 = pneg %p371
        %p787 = pneg %p368
        %p788 = scmp.lt.s32.totalorder %s41, 1
        %s789 = scalar_select %p788, %s41, 1
        %s790 = scalar_lea.vmem %s13, %s789
        %p791 = pneg %p397
        %p792 = pneg %p394
        %p793 = scmp.lt.s32.totalorder %s41, 1
        %s794 = scalar_select %p793, %s41, 1
        %s795 = scalar_lea.vmem %s14, %s794
        %p796 = pneg %p423
        %p797 = pneg %p420
        %s798 = sand.u32 %s36, 1
        %s799 = scalar_lea.sflag [#allocation4], %s798
        %s800 = sand.u32 %s436, 1
        %s801 = scalar_lea.vmem [#allocation12], %s800
        %p802 = pneg %p449
        %p803 = pneg %p446
        %p804 = pneg %p475
        %p805 = pneg %p472
        %p806 = pneg %p503
        %p807 = pneg %p500
        %s808 = sand.u32 %s490, 1
        %s809 = scalar_lea.sflag [#allocation15], %s808
        %s810 = sand.u32 %s490, 1
        %s811 = smul.addr %s810, 64
        %s812 = scalar_lea.vmem [#allocation14], %s811
        %s813 = smul.u32 2, %s40
        %s814 = smul.u32 2, %s40
        %p815 = scmp.lt.s32.totalorder %s41, 1
        %s816 = scalar_select %p815, %s41, 1
        %s817 = smul.addr %s816, 4
        %s818 = smul.addr %s817, 4
        %s819 = scalar_lea.vmem %s4, %s818
        %p820 = scmp.lt.s32.totalorder %s41, 1
        %s821 = scalar_select %p820, %s41, 1
        %s822 = scalar_lea.vmem %s5, %s821
        %p823 = scmp.lt.s32.totalorder %s41, 1
        %s824 = scalar_select %p823, %s41, 1
        %s825 = smul.addr %s824, 4
        %s826 = smul.addr %s825, 4
        %s827 = scalar_lea.vmem %s6, %s826
        %p828 = scmp.lt.s32.totalorder %s41, 1
        %s829 = scalar_select %p828, %s41, 1
        %s830 = scalar_lea.vmem %s7, %s829
        %p831 = scmp.lt.s32.totalorder %s41, 1
        %s832 = scalar_select %p831, %s41, 1
        %s833 = scalar_lea.vmem %s8, %s832
        %p834 = scmp.lt.s32.totalorder %s41, 1
        %s835 = scalar_select %p834, %s41, 1
        %s836 = smul.addr %s835, 4
        %s837 = smul.addr %s836, 4
        %s838 = scalar_lea.vmem %s10, %s837
        %p839 = scmp.lt.s32.totalorder %s41, 1
        %s840 = scalar_select %p839, %s41, 1
        %s841 = scalar_lea.vmem %s11, %s840
        %p842 = scmp.lt.s32.totalorder %s41, 1
        %s843 = scalar_select %p842, %s41, 1
        %s844 = smul.addr %s843, 8
        %s845 = smul.addr %s844, 4
        %s846 = scalar_lea.vmem %s12, %s845
        %p847 = scmp.lt.s32.totalorder %s41, 1
        %s848 = scalar_select %p847, %s41, 1
        %s849 = scalar_lea.vmem %s13, %s848
        %p850 = scmp.lt.s32.totalorder %s41, 1
        %s851 = scalar_select %p850, %s41, 1
        %s852 = scalar_lea.vmem %s14, %s851
        %s853 = smul.u32 2, %s40
        %s854 = sadd.s32 %s41, %s40
        %s855 = smul.u32 2, %s854
        %p857 = scmp.eq.s32.totalorder %s41, 0
        // Predicated region
        $region109: #{tpu_custom_call.1} parent=83 // pred_check
          %p858 = pneg %p857
        $region110: #{tpu_custom_call.1} parent=83 // pred_check_branch
          %860 = sbr.rel (%p858) target = $region112
        $region111: #{tpu_custom_call.1} parent=83 // pred_region
          %v861 = vld [vmem:[#allocation3] sm:$0xff]
          %v862 = vld [vmem:[#allocation3 + $0x8] sm:$0xff]
          %v863 = vld [vmem:[#allocation8] sm:$0xff]
          %v864 = vld [vmem:[#allocation9] sm:$0xff]
          %v865 = vmul.f32 %v861, %v863
          %v866 = vmul.f32 %v862, %v863
          %vm867 = vcmask 1047808
          %868 = vrot.lane.b32.xlu0 %v861, 32
          %v869 = vpop.permute.xlu0 %868
          %v870 = vsel %vm867, %v869, %v861
          %871 = vrot.lane.b32.xlu0 %v862, 32
          %v872 = vpop.permute.xlu0 %871
          %v873 = vsel %vm867, %v872, %v862
          %874 = vrot.lane.b32.xlu0 %v870, 32
          %v875 = vpop.permute.xlu0 %874
          %876 = vrot.lane.b32.xlu0 %v873, 32
          %v877 = vpop.permute.xlu0 %876
          %v878 = vsel %vm867, %v875, %v861
          %v879 = vsel %vm867, %v877, %v862
          %881 = vrot.lane.b32.xlu0 %v864, 16
          %v882 = vpop.permute.xlu0 %881
          %v884 = vmul.f32 %v878, %v882
          %v885 = vmul.f32 %v879, %v882
          %888 = vrot.lane.b32.xlu0 %v884, 112
          %v889 = vpop.permute.xlu0 %888
          %890 = vrot.lane.b32.xlu0 %v885, 112
          %v891 = vpop.permute.xlu0 %890
          %v894 = vadd.f32 %v865, %v889
          %v895 = vadd.f32 %v866, %v891
          %vm896 = vcmask 261120
          %897 = vst.msk [vmem:[#allocation2] sm:$0xff] %vm896, %v894
          %898 = vst.msk [vmem:[#allocation2 + $0x8] sm:$0xff] %vm896, %v895
        $region112: #{tpu_custom_call.1} parent=83 // pred_fallthru
          _
        %v899 = vld [vmem:[#allocation2] sm:$0xff]
        %v900 = vld [vmem:[#allocation2 + $0x8] sm:$0xff]
        %v901 = vpack.c.bf16 %v900, %v899
        %v902 = vld [vmem:[%s819] sm:$0xf]
        %v903 = vld [vmem:[%s819 + $0x4] sm:$0xf]
        %v904 = vld [vmem:[%s819 + $0x8] sm:$0xf]
        %v905 = vld [vmem:[%s819 + $0xc] sm:$0xf]
        %v906 = vld [vmem:[%s822] sm:$0x1]
        %v908 = vperm.slane %v906, 0
        %v914 = vunpack.c.l.b16 %v902
        %v915 = vunpack.c.l.b16 %v903
        %v916 = vunpack.c.l.b16 %v904
        %v917 = vunpack.c.l.b16 %v905
        %v918 = vpack.c.b16 %v915, %v914
        %v919 = vpack.c.b16 %v917, %v916
        %vm922 = vcmask 261120
        %v924 = vsel %vm922, %v901, 0
        %926 = vmatpush.bf16.msra.mxu0 0
        %927 = vmatpush.bf16.msra.mxu0 0
        %928 = vmatpush.bf16.msra.mxu0 0
        %929 = vmatpush.bf16.msra.mxu0 0
        %930 = vmatpush.bf16.msra.mxu0 0
        %931 = vmatpush.bf16.msra.mxu0 0
        %932 = vmatpush.bf16.msra.mxu0 %v919
        %933 = vmatpush.bf16.msra.mxu0 %v918
        %934 = vmatmul.bf16.gmra.mxu0 %v924
        %v935 = vpop.f32.mrf.mxu0
        %v936 = vadd.f32 %v908, %v935
        %v937 = vpop.f32.mrf.mxu0
        %v938 = vadd.f32 %v908, %v937
        %939 = vdwg.mxu0
        %942 = vrot.lane.b32.xlu0 %v936, 120
        %v943 = vpop.permute.xlu0 %942
        %944 = vrot.lane.b32.xlu0 %v938, 120
        %v945 = vpop.permute.xlu0 %944
        %948 = vrot.lane.b32.xlu0 %v936, 112
        %v949 = vpop.permute.xlu0 %948
        %950 = vrot.lane.b32.xlu0 %v938, 112
        %v951 = vpop.permute.xlu0 %950
        %954 = vrot.lane.b32.xlu0 %v936, 104
        %v955 = vpop.permute.xlu0 %954
        %956 = vrot.lane.b32.xlu0 %v938, 104
        %v957 = vpop.permute.xlu0 %956
        %v960 = vrot.slane %v949, 4
        %vm961 = vcmask 1047556
        %v962 = vsel %vm961, %v960, %v936
        %v963 = vrot.slane %v936, 4
        %v964 = vsel %vm961, %v949, %v963
        %v966 = vunpack.c.l.s4 1983009808
        %v967 = vunpack.c.0.s8 %v966
        %v968 = vperm.slane %v962, %v967
        %v970 = vunpack.c.l.s4 1983009808
        %v971 = vunpack.c.0.s8 %v970
        %v972 = vperm.slane %v964, %v971
        %v973 = vrot.slane %v955, 4
        %v974 = vsel %vm961, %v973, %v943
        %v975 = vrot.slane %v943, 4
        %v976 = vsel %vm961, %v955, %v975
        %v978 = vunpack.c.l.s4 1983009808
        %v979 = vunpack.c.0.s8 %v978
        %v980 = vperm.slane %v974, %v979
        %v982 = vunpack.c.l.s4 1983009808
        %v983 = vunpack.c.0.s8 %v982
        %v984 = vperm.slane %v976, %v983
        %v985 = vrot.slane %v980, 4
        %v986 = vsel %vm961, %v985, %v968
        %v987 = vrot.slane %v968, 4
        %v988 = vsel %vm961, %v980, %v987
        %v990 = vunpack.c.l.s4 1934713408
        %v991 = vunpack.c.0.s8 %v990
        %v992 = vperm.slane %v986, %v991
        %v994 = vunpack.c.l.s4 1934713408
        %v995 = vunpack.c.0.s8 %v994
        %v996 = vperm.slane %v988, %v995
        %v997 = vrot.slane %v984, 4
        %v998 = vsel %vm961, %v997, %v972
        %v999 = vrot.slane %v972, 4
        %v1000 = vsel %vm961, %v984, %v999
        %v1002 = vunpack.c.l.s4 1934713408
        %v1003 = vunpack.c.0.s8 %v1002
        %v1004 = vperm.slane %v998, %v1003
        %v1006 = vunpack.c.l.s4 1934713408
        %v1007 = vunpack.c.0.s8 %v1006
        %v1008 = vperm.slane %v1000, %v1007
        %v1009 = vrot.slane %v992, 4
        %v1010 = vsel %vm961, 0.0, %v1009
        %v1011 = vrot.slane %v996, 4
        %v1012 = vsel %vm961, 0.0, %v1011
        %v1013 = vrot.slane %v1004, 4
        %v1014 = vsel %vm961, 0.0, %v1013
        %v1015 = vrot.slane %v1008, 4
        %v1016 = vsel %vm961, 0.0, %v1015
        %v1017 = vrot.slane %v951, 4
        %v1018 = vsel %vm961, %v1017, %v938
        %v1019 = vrot.slane %v938, 4
        %v1020 = vsel %vm961, %v951, %v1019
        %v1022 = vunpack.c.l.s4 1983009808
        %v1023 = vunpack.c.0.s8 %v1022
        %v1024 = vperm.slane %v1018, %v1023
        %v1026 = vunpack.c.l.s4 1983009808
        %v1027 = vunpack.c.0.s8 %v1026
        %v1028 = vperm.slane %v1020, %v1027
        %v1029 = vrot.slane %v957, 4
        %v1030 = vsel %vm961, %v1029, %v945
        %v1031 = vrot.slane %v945, 4
        %v1032 = vsel %vm961, %v957, %v1031
        %v1034 = vunpack.c.l.s4 1983009808
        %v1035 = vunpack.c.0.s8 %v1034
        %v1036 = vperm.slane %v1030, %v1035
        %v1038 = vunpack.c.l.s4 1983009808
        %v1039 = vunpack.c.0.s8 %v1038
        %v1040 = vperm.slane %v1032, %v1039
        %v1041 = vrot.slane %v1036, 4
        %v1042 = vsel %vm961, %v1041, %v1024
        %v1043 = vrot.slane %v1024, 4
        %v1044 = vsel %vm961, %v1036, %v1043
        %v1046 = vunpack.c.l.s4 1934713408
        %v1047 = vunpack.c.0.s8 %v1046
        %v1048 = vperm.slane %v1042, %v1047
        %v1050 = vunpack.c.l.s4 1934713408
        %v1051 = vunpack.c.0.s8 %v1050
        %v1052 = vperm.slane %v1044, %v1051
        %v1053 = vrot.slane %v1040, 4
        %v1054 = vsel %vm961, %v1053, %v1028
        %v1055 = vrot.slane %v1028, 4
        %v1056 = vsel %vm961, %v1040, %v1055
        %v1058 = vunpack.c.l.s4 1934713408
        %v1059 = vunpack.c.0.s8 %v1058
        %v1060 = vperm.slane %v1054, %v1059
        %v1062 = vunpack.c.l.s4 1934713408
        %v1063 = vunpack.c.0.s8 %v1062
        %v1064 = vperm.slane %v1056, %v1063
        %v1065 = vrot.slane %v1048, 4
        %v1066 = vsel %vm961, 0.0, %v1065
        %v1067 = vrot.slane %v1052, 4
        %v1068 = vsel %vm961, 0.0, %v1067
        %v1069 = vrot.slane %v1060, 4
        %v1070 = vsel %vm961, 0.0, %v1069
        %v1071 = vrot.slane %v1064, 4
        %v1072 = vsel %vm961, 0.0, %v1071
        %v1073 = vsel %vm961, %v1011, %v992
        %v1075 = vunpack.c.l.s4 1983009808
        %v1076 = vunpack.c.0.s8 %v1075
        %v1077 = vperm.slane %v1073, %v1076
        %v1078 = vrot.slane %v1012, 4
        %v1079 = vsel %vm961, %v1078, %v1010
        %v1081 = vunpack.c.l.s4 1983009808
        %v1082 = vunpack.c.0.s8 %v1081
        %v1083 = vperm.slane %v1079, %v1082
        %v1084 = vsel %vm961, %v1015, %v1004
        %v1086 = vunpack.c.l.s4 1983009808
        %v1087 = vunpack.c.0.s8 %v1086
        %v1088 = vperm.slane %v1084, %v1087
        %v1089 = vrot.slane %v1016, 4
        %v1090 = vsel %vm961, %v1089, %v1014
        %v1092 = vunpack.c.l.s4 1983009808
        %v1093 = vunpack.c.0.s8 %v1092
        %v1094 = vperm.slane %v1090, %v1093
        %v1095 = vrot.slane %v1083, 4
        %v1096 = vsel %vm961, %v1095, %v1077
        %v1097 = vrot.slane %v1077, 4
        %v1098 = vsel %vm961, %v1083, %v1097
        %v1100 = vunpack.c.l.s4 1934713408
        %v1101 = vunpack.c.0.s8 %v1100
        %v1102 = vperm.slane %v1096, %v1101
        %v1104 = vunpack.c.l.s4 1934713408
        %v1105 = vunpack.c.0.s8 %v1104
        %v1106 = vperm.slane %v1098, %v1105
        %v1107 = vrot.slane %v1094, 4
        %v1108 = vsel %vm961, %v1107, %v1088
        %v1109 = vrot.slane %v1088, 4
        %v1110 = vsel %vm961, %v1094, %v1109
        %v1112 = vunpack.c.l.s4 1934713408
        %v1113 = vunpack.c.0.s8 %v1112
        %v1114 = vperm.slane %v1108, %v1113
        %v1116 = vunpack.c.l.s4 1934713408
        %v1117 = vunpack.c.0.s8 %v1116
        %v1118 = vperm.slane %v1110, %v1117
        %v1119 = vrot.slane %v1114, 4
        %v1120 = vsel %vm961, %v1119, %v1102
        %v1121 = vrot.slane %v1102, 4
        %v1122 = vsel %vm961, %v1114, %v1121
        %v1123 = vrot.slane %v1118, 4
        %v1124 = vsel %vm961, %v1123, %v1106
        %v1125 = vrot.slane %v1106, 4
        %v1126 = vsel %vm961, %v1118, %v1125
        %v1127 = vsel %vm961, %v1067, %v1048
        %v1129 = vunpack.c.l.s4 1983009808
        %v1130 = vunpack.c.0.s8 %v1129
        %v1131 = vperm.slane %v1127, %v1130
        %v1132 = vrot.slane %v1068, 4
        %v1133 = vsel %vm961, %v1132, %v1066
        %v1135 = vunpack.c.l.s4 1983009808
        %v1136 = vunpack.c.0.s8 %v1135
        %v1137 = vperm.slane %v1133, %v1136
        %v1138 = vsel %vm961, %v1071, %v1060
        %v1140 = vunpack.c.l.s4 1983009808
        %v1141 = vunpack.c.0.s8 %v1140
        %v1142 = vperm.slane %v1138, %v1141
        %v1143 = vrot.slane %v1072, 4
        %v1144 = vsel %vm961, %v1143, %v1070
        %v1146 = vunpack.c.l.s4 1983009808
        %v1147 = vunpack.c.0.s8 %v1146
        %v1148 = vperm.slane %v1144, %v1147
        %v1149 = vrot.slane %v1137, 4
        %v1150 = vsel %vm961, %v1149, %v1131
        %v1151 = vrot.slane %v1131, 4
        %v1152 = vsel %vm961, %v1137, %v1151
        %v1154 = vunpack.c.l.s4 1934713408
        %v1155 = vunpack.c.0.s8 %v1154
        %v1156 = vperm.slane %v1150, %v1155
        %v1158 = vunpack.c.l.s4 1934713408
        %v1159 = vunpack.c.0.s8 %v1158
        %v1160 = vperm.slane %v1152, %v1159
        %v1161 = vrot.slane %v1148, 4
        %v1162 = vsel %vm961, %v1161, %v1142
        %v1163 = vrot.slane %v1142, 4
        %v1164 = vsel %vm961, %v1148, %v1163
        %v1166 = vunpack.c.l.s4 1934713408
        %v1167 = vunpack.c.0.s8 %v1166
        %v1168 = vperm.slane %v1162, %v1167
        %v1170 = vunpack.c.l.s4 1934713408
        %v1171 = vunpack.c.0.s8 %v1170
        %v1172 = vperm.slane %v1164, %v1171
        %v1173 = vrot.slane %v1168, 4
        %v1174 = vsel %vm961, %v1173, %v1156
        %v1175 = vrot.slane %v1156, 4
        %v1176 = vsel %vm961, %v1168, %v1175
        %v1177 = vrot.slane %v1172, 4
        %v1178 = vsel %vm961, %v1177, %v1160
        %v1179 = vrot.slane %v1160, 4
        %v1180 = vsel %vm961, %v1172, %v1179
        %v1181 = vpack.c.bf16 %v1120, %v1120
        %v1182 = vpack.c.bf16 %v1122, %v1122
        %v1183 = vpack.c.bf16 %v1124, %v1124
        %v1184 = vpack.c.bf16 %v1126, %v1126
        %v1185 = vpack.c.bf16 %v1174, %v1174
        %v1186 = vpack.c.bf16 %v1176, %v1176
        %v1187 = vpack.c.bf16 %v1178, %v1178
        %v1188 = vpack.c.bf16 %v1180, %v1180
        %1189 = vrot.lane.b32.xlu0 %v936, 96
        %v1190 = vpop.permute.xlu0 %1189
        %1191 = vrot.lane.b32.xlu0 %v938, 96
        %v1192 = vpop.permute.xlu0 %1191
        %1193 = vrot.lane.b32.xlu0 %v943, 96
        %v1194 = vpop.permute.xlu0 %1193
        %1195 = vrot.lane.b32.xlu0 %v945, 96
        %v1196 = vpop.permute.xlu0 %1195
        %1197 = vrot.lane.b32.xlu0 %v949, 96
        %v1198 = vpop.permute.xlu0 %1197
        %1199 = vrot.lane.b32.xlu0 %v951, 96
        %v1200 = vpop.permute.xlu0 %1199
        %1201 = vrot.lane.b32.xlu0 %v955, 96
        %v1202 = vpop.permute.xlu0 %1201
        %1203 = vrot.lane.b32.xlu0 %v957, 96
        %v1204 = vpop.permute.xlu0 %1203
        %v1213 = vrot.slane %v1198, 4
        %v1214 = vsel %vm961, %v1213, %v1190
        %v1215 = vrot.slane %v1190, 4
        %v1216 = vsel %vm961, %v1198, %v1215
        %v1218 = vunpack.c.l.s4 1983009808
        %v1219 = vunpack.c.0.s8 %v1218
        %v1220 = vperm.slane %v1214, %v1219
        %v1222 = vunpack.c.l.s4 1983009808
        %v1223 = vunpack.c.0.s8 %v1222
        %v1224 = vperm.slane %v1216, %v1223
        %v1225 = vrot.slane %v1202, 4
        %v1226 = vsel %vm961, %v1225, %v1194
        %v1227 = vrot.slane %v1194, 4
        %v1228 = vsel %vm961, %v1202, %v1227
        %v1230 = vunpack.c.l.s4 1983009808
        %v1231 = vunpack.c.0.s8 %v1230
        %v1232 = vperm.slane %v1226, %v1231
        %v1234 = vunpack.c.l.s4 1983009808
        %v1235 = vunpack.c.0.s8 %v1234
        %v1236 = vperm.slane %v1228, %v1235
        %v1237 = vrot.slane %v1232, 4
        %v1238 = vsel %vm961, %v1237, %v1220
        %v1239 = vrot.slane %v1220, 4
        %v1240 = vsel %vm961, %v1232, %v1239
        %v1242 = vunpack.c.l.s4 1934713408
        %v1243 = vunpack.c.0.s8 %v1242
        %v1244 = vperm.slane %v1238, %v1243
        %v1246 = vunpack.c.l.s4 1934713408
        %v1247 = vunpack.c.0.s8 %v1246
        %v1248 = vperm.slane %v1240, %v1247
        %v1249 = vrot.slane %v1236, 4
        %v1250 = vsel %vm961, %v1249, %v1224
        %v1251 = vrot.slane %v1224, 4
        %v1252 = vsel %vm961, %v1236, %v1251
        %v1254 = vunpack.c.l.s4 1934713408
        %v1255 = vunpack.c.0.s8 %v1254
        %v1256 = vperm.slane %v1250, %v1255
        %v1258 = vunpack.c.l.s4 1934713408
        %v1259 = vunpack.c.0.s8 %v1258
        %v1260 = vperm.slane %v1252, %v1259
        %v1261 = vrot.slane %v1244, 4
        %v1262 = vsel %vm961, 0.0, %v1261
        %v1263 = vrot.slane %v1248, 4
        %v1264 = vsel %vm961, 0.0, %v1263
        %v1265 = vrot.slane %v1256, 4
        %v1266 = vsel %vm961, 0.0, %v1265
        %v1267 = vrot.slane %v1260, 4
        %v1268 = vsel %vm961, 0.0, %v1267
        %v1269 = vrot.slane %v1200, 4
        %v1270 = vsel %vm961, %v1269, %v1192
        %v1271 = vrot.slane %v1192, 4
        %v1272 = vsel %vm961, %v1200, %v1271
        %v1274 = vunpack.c.l.s4 1983009808
        %v1275 = vunpack.c.0.s8 %v1274
        %v1276 = vperm.slane %v1270, %v1275
        %v1278 = vunpack.c.l.s4 1983009808
        %v1279 = vunpack.c.0.s8 %v1278
        %v1280 = vperm.slane %v1272, %v1279
        %v1281 = vrot.slane %v1204, 4
        %v1282 = vsel %vm961, %v1281, %v1196
        %v1283 = vrot.slane %v1196, 4
        %v1284 = vsel %vm961, %v1204, %v1283
        %v1286 = vunpack.c.l.s4 1983009808
        %v1287 = vunpack.c.0.s8 %v1286
        %v1288 = vperm.slane %v1282, %v1287
        %v1290 = vunpack.c.l.s4 1983009808
        %v1291 = vunpack.c.0.s8 %v1290
        %v1292 = vperm.slane %v1284, %v1291
        %v1293 = vrot.slane %v1288, 4
        %v1294 = vsel %vm961, %v1293, %v1276
        %v1295 = vrot.slane %v1276, 4
        %v1296 = vsel %vm961, %v1288, %v1295
        %v1298 = vunpack.c.l.s4 1934713408
        %v1299 = vunpack.c.0.s8 %v1298
        %v1300 = vperm.slane %v1294, %v1299
        %v1302 = vunpack.c.l.s4 1934713408
        %v1303 = vunpack.c.0.s8 %v1302
        %v1304 = vperm.slane %v1296, %v1303
        %v1305 = vrot.slane %v1292, 4
        %v1306 = vsel %vm961, %v1305, %v1280
        %v1307 = vrot.slane %v1280, 4
        %v1308 = vsel %vm961, %v1292, %v1307
        %v1310 = vunpack.c.l.s4 1934713408
        %v1311 = vunpack.c.0.s8 %v1310
        %v1312 = vperm.slane %v1306, %v1311
        %v1314 = vunpack.c.l.s4 1934713408
        %v1315 = vunpack.c.0.s8 %v1314
        %v1316 = vperm.slane %v1308, %v1315
        %v1317 = vrot.slane %v1300, 4
        %v1318 = vsel %vm961, 0.0, %v1317
        %v1319 = vrot.slane %v1304, 4
        %v1320 = vsel %vm961, 0.0, %v1319
        %v1321 = vrot.slane %v1312, 4
        %v1322 = vsel %vm961, 0.0, %v1321
        %v1323 = vrot.slane %v1316, 4
        %v1324 = vsel %vm961, 0.0, %v1323
        %v1325 = vsel %vm961, %v1263, %v1244
        %v1327 = vunpack.c.l.s4 1983009808
        %v1328 = vunpack.c.0.s8 %v1327
        %v1329 = vperm.slane %v1325, %v1328
        %v1330 = vrot.slane %v1264, 4
        %v1331 = vsel %vm961, %v1330, %v1262
        %v1333 = vunpack.c.l.s4 1983009808
        %v1334 = vunpack.c.0.s8 %v1333
        %v1335 = vperm.slane %v1331, %v1334
        %v1336 = vsel %vm961, %v1267, %v1256
        %v1338 = vunpack.c.l.s4 1983009808
        %v1339 = vunpack.c.0.s8 %v1338
        %v1340 = vperm.slane %v1336, %v1339
        %v1341 = vrot.slane %v1268, 4
        %v1342 = vsel %vm961, %v1341, %v1266
        %v1344 = vunpack.c.l.s4 1983009808
        %v1345 = vunpack.c.0.s8 %v1344
        %v1346 = vperm.slane %v1342, %v1345
        %v1347 = vrot.slane %v1335, 4
        %v1348 = vsel %vm961, %v1347, %v1329
        %v1349 = vrot.slane %v1329, 4
        %v1350 = vsel %vm961, %v1335, %v1349
        %v1352 = vunpack.c.l.s4 1934713408
        %v1353 = vunpack.c.0.s8 %v1352
        %v1354 = vperm.slane %v1348, %v1353
        %v1356 = vunpack.c.l.s4 1934713408
        %v1357 = vunpack.c.0.s8 %v1356
        %v1358 = vperm.slane %v1350, %v1357
        %v1359 = vrot.slane %v1346, 4
        %v1360 = vsel %vm961, %v1359, %v1340
        %v1361 = vrot.slane %v1340, 4
        %v1362 = vsel %vm961, %v1346, %v1361
        %v1364 = vunpack.c.l.s4 1934713408
        %v1365 = vunpack.c.0.s8 %v1364
        %v1366 = vperm.slane %v1360, %v1365
        %v1368 = vunpack.c.l.s4 1934713408
        %v1369 = vunpack.c.0.s8 %v1368
        %v1370 = vperm.slane %v1362, %v1369
        %v1371 = vrot.slane %v1366, 4
        %v1372 = vsel %vm961, %v1371, %v1354
        %v1373 = vrot.slane %v1354, 4
        %v1374 = vsel %vm961, %v1366, %v1373
        %v1375 = vrot.slane %v1370, 4
        %v1376 = vsel %vm961, %v1375, %v1358
        %v1377 = vrot.slane %v1358, 4
        %v1378 = vsel %vm961, %v1370, %v1377
        %v1379 = vsel %vm961, %v1319, %v1300
        %v1381 = vunpack.c.l.s4 1983009808
        %v1382 = vunpack.c.0.s8 %v1381
        %v1383 = vperm.slane %v1379, %v1382
        %v1384 = vrot.slane %v1320, 4
        %v1385 = vsel %vm961, %v1384, %v1318
        %v1387 = vunpack.c.l.s4 1983009808
        %v1388 = vunpack.c.0.s8 %v1387
        %v1389 = vperm.slane %v1385, %v1388
        %v1390 = vsel %vm961, %v1323, %v1312
        %v1392 = vunpack.c.l.s4 1983009808
        %v1393 = vunpack.c.0.s8 %v1392
        %v1394 = vperm.slane %v1390, %v1393
        %v1395 = vrot.slane %v1324, 4
        %v1396 = vsel %vm961, %v1395, %v1322
        %v1398 = vunpack.c.l.s4 1983009808
        %v1399 = vunpack.c.0.s8 %v1398
        %v1400 = vperm.slane %v1396, %v1399
        %v1401 = vrot.slane %v1389, 4
        %v1402 = vsel %vm961, %v1401, %v1383
        %v1403 = vrot.slane %v1383, 4
        %v1404 = vsel %vm961, %v1389, %v1403
        %v1406 = vunpack.c.l.s4 1934713408
        %v1407 = vunpack.c.0.s8 %v1406
        %v1408 = vperm.slane %v1402, %v1407
        %v1410 = vunpack.c.l.s4 1934713408
        %v1411 = vunpack.c.0.s8 %v1410
        %v1412 = vperm.slane %v1404, %v1411
        %v1413 = vrot.slane %v1400, 4
        %v1414 = vsel %vm961, %v1413, %v1394
        %v1415 = vrot.slane %v1394, 4
        %v1416 = vsel %vm961, %v1400, %v1415
        %v1418 = vunpack.c.l.s4 1934713408
        %v1419 = vunpack.c.0.s8 %v1418
        %v1420 = vperm.slane %v1414, %v1419
        %v1422 = vunpack.c.l.s4 1934713408
        %v1423 = vunpack.c.0.s8 %v1422
        %v1424 = vperm.slane %v1416, %v1423
        %v1425 = vrot.slane %v1420, 4
        %v1426 = vsel %vm961, %v1425, %v1408
        %v1427 = vrot.slane %v1408, 4
        %v1428 = vsel %vm961, %v1420, %v1427
        %v1429 = vrot.slane %v1424, 4
        %v1430 = vsel %vm961, %v1429, %v1412
        %v1431 = vrot.slane %v1412, 4
        %v1432 = vsel %vm961, %v1424, %v1431
        %v1433 = vpack.c.bf16 %v1372, %v1372
        %v1434 = vpack.c.bf16 %v1374, %v1374
        %v1435 = vpack.c.bf16 %v1376, %v1376
        %v1436 = vpack.c.bf16 %v1378, %v1378
        %v1437 = vpack.c.bf16 %v1426, %v1426
        %v1438 = vpack.c.bf16 %v1428, %v1428
        %v1439 = vpack.c.bf16 %v1430, %v1430
        %v1440 = vpack.c.bf16 %v1432, %v1432
        %1441 = vrot.lane.b32.xlu0 %v936, 64
        %v1442 = vpop.permute.xlu0 %1441
        %1443 = vrot.lane.b32.xlu0 %v938, 64
        %v1444 = vpop.permute.xlu0 %1443
        %1445 = vrot.lane.b32.xlu0 %v943, 64
        %v1446 = vpop.permute.xlu0 %1445
        %1447 = vrot.lane.b32.xlu0 %v945, 64
        %v1448 = vpop.permute.xlu0 %1447
        %1449 = vrot.lane.b32.xlu0 %v949, 64
        %v1450 = vpop.permute.xlu0 %1449
        %1451 = vrot.lane.b32.xlu0 %v951, 64
        %v1452 = vpop.permute.xlu0 %1451
        %1453 = vrot.lane.b32.xlu0 %v955, 64
        %v1454 = vpop.permute.xlu0 %1453
        %1455 = vrot.lane.b32.xlu0 %v957, 64
        %v1456 = vpop.permute.xlu0 %1455
        %v1465 = vrot.slane %v1450, 4
        %v1466 = vsel %vm961, %v1465, %v1442
        %v1467 = vrot.slane %v1442, 4
        %v1468 = vsel %vm961, %v1450, %v1467
        %v1470 = vunpack.c.l.s4 1983009808
        %v1471 = vunpack.c.0.s8 %v1470
        %v1472 = vperm.slane %v1466, %v1471
        %v1474 = vunpack.c.l.s4 1983009808
        %v1475 = vunpack.c.0.s8 %v1474
        %v1476 = vperm.slane %v1468, %v1475
        %v1477 = vrot.slane %v1454, 4
        %v1478 = vsel %vm961, %v1477, %v1446
        %v1479 = vrot.slane %v1446, 4
        %v1480 = vsel %vm961, %v1454, %v1479
        %v1482 = vunpack.c.l.s4 1983009808
        %v1483 = vunpack.c.0.s8 %v1482
        %v1484 = vperm.slane %v1478, %v1483
        %v1486 = vunpack.c.l.s4 1983009808
        %v1487 = vunpack.c.0.s8 %v1486
        %v1488 = vperm.slane %v1480, %v1487
        %v1489 = vrot.slane %v1484, 4
        %v1490 = vsel %vm961, %v1489, %v1472
        %v1491 = vrot.slane %v1472, 4
        %v1492 = vsel %vm961, %v1484, %v1491
        %v1494 = vunpack.c.l.s4 1934713408
        %v1495 = vunpack.c.0.s8 %v1494
        %v1496 = vperm.slane %v1490, %v1495
        %v1498 = vunpack.c.l.s4 1934713408
        %v1499 = vunpack.c.0.s8 %v1498
        %v1500 = vperm.slane %v1492, %v1499
        %v1501 = vrot.slane %v1488, 4
        %v1502 = vsel %vm961, %v1501, %v1476
        %v1503 = vrot.slane %v1476, 4
        %v1504 = vsel %vm961, %v1488, %v1503
        %v1506 = vunpack.c.l.s4 1934713408
        %v1507 = vunpack.c.0.s8 %v1506
        %v1508 = vperm.slane %v1502, %v1507
        %v1510 = vunpack.c.l.s4 1934713408
        %v1511 = vunpack.c.0.s8 %v1510
        %v1512 = vperm.slane %v1504, %v1511
        %v1513 = vrot.slane %v1496, 4
        %v1514 = vsel %vm961, 0.0, %v1513
        %v1515 = vrot.slane %v1500, 4
        %v1516 = vsel %vm961, 0.0, %v1515
        %v1517 = vrot.slane %v1508, 4
        %v1518 = vsel %vm961, 0.0, %v1517
        %v1519 = vrot.slane %v1512, 4
        %v1520 = vsel %vm961, 0.0, %v1519
        %v1521 = vrot.slane %v1452, 4
        %v1522 = vsel %vm961, %v1521, %v1444
        %v1523 = vrot.slane %v1444, 4
        %v1524 = vsel %vm961, %v1452, %v1523
        %v1526 = vunpack.c.l.s4 1983009808
        %v1527 = vunpack.c.0.s8 %v1526
        %v1528 = vperm.slane %v1522, %v1527
        %v1530 = vunpack.c.l.s4 1983009808
        %v1531 = vunpack.c.0.s8 %v1530
        %v1532 = vperm.slane %v1524, %v1531
        %v1533 = vrot.slane %v1456, 4
        %v1534 = vsel %vm961, %v1533, %v1448
        %v1535 = vrot.slane %v1448, 4
        %v1536 = vsel %vm961, %v1456, %v1535
        %v1538 = vunpack.c.l.s4 1983009808
        %v1539 = vunpack.c.0.s8 %v1538
        %v1540 = vperm.slane %v1534, %v1539
        %v1542 = vunpack.c.l.s4 1983009808
        %v1543 = vunpack.c.0.s8 %v1542
        %v1544 = vperm.slane %v1536, %v1543
        %v1545 = vrot.slane %v1540, 4
        %v1546 = vsel %vm961, %v1545, %v1528
        %v1547 = vrot.slane %v1528, 4
        %v1548 = vsel %vm961, %v1540, %v1547
        %v1550 = vunpack.c.l.s4 1934713408
        %v1551 = vunpack.c.0.s8 %v1550
        %v1552 = vperm.slane %v1546, %v1551
        %v1554 = vunpack.c.l.s4 1934713408
        %v1555 = vunpack.c.0.s8 %v1554
        %v1556 = vperm.slane %v1548, %v1555
        %v1557 = vrot.slane %v1544, 4
        %v1558 = vsel %vm961, %v1557, %v1532
        %v1559 = vrot.slane %v1532, 4
        %v1560 = vsel %vm961, %v1544, %v1559
        %v1562 = vunpack.c.l.s4 1934713408
        %v1563 = vunpack.c.0.s8 %v1562
        %v1564 = vperm.slane %v1558, %v1563
        %v1566 = vunpack.c.l.s4 1934713408
        %v1567 = vunpack.c.0.s8 %v1566
        %v1568 = vperm.slane %v1560, %v1567
        %v1569 = vrot.slane %v1552, 4
        %v1570 = vsel %vm961, 0.0, %v1569
        %v1571 = vrot.slane %v1556, 4
        %v1572 = vsel %vm961, 0.0, %v1571
        %v1573 = vrot.slane %v1564, 4
        %v1574 = vsel %vm961, 0.0, %v1573
        %v1575 = vrot.slane %v1568, 4
        %v1576 = vsel %vm961, 0.0, %v1575
        %v1577 = vsel %vm961, %v1515, %v1496
        %v1579 = vunpack.c.l.s4 1983009808
        %v1580 = vunpack.c.0.s8 %v1579
        %v1581 = vperm.slane %v1577, %v1580
        %v1582 = vrot.slane %v1516, 4
        %v1583 = vsel %vm961, %v1582, %v1514
        %v1585 = vunpack.c.l.s4 1983009808
        %v1586 = vunpack.c.0.s8 %v1585
        %v1587 = vperm.slane %v1583, %v1586
        %v1588 = vsel %vm961, %v1519, %v1508
        %v1590 = vunpack.c.l.s4 1983009808
        %v1591 = vunpack.c.0.s8 %v1590
        %v1592 = vperm.slane %v1588, %v1591
        %v1593 = vrot.slane %v1520, 4
        %v1594 = vsel %vm961, %v1593, %v1518
        %v1596 = vunpack.c.l.s4 1983009808
        %v1597 = vunpack.c.0.s8 %v1596
        %v1598 = vperm.slane %v1594, %v1597
        %v1599 = vrot.slane %v1587, 4
        %v1600 = vsel %vm961, %v1599, %v1581
        %v1601 = vrot.slane %v1581, 4
        %v1602 = vsel %vm961, %v1587, %v1601
        %v1604 = vunpack.c.l.s4 1934713408
        %v1605 = vunpack.c.0.s8 %v1604
        %v1606 = vperm.slane %v1600, %v1605
        %v1608 = vunpack.c.l.s4 1934713408
        %v1609 = vunpack.c.0.s8 %v1608
        %v1610 = vperm.slane %v1602, %v1609
        %v1611 = vrot.slane %v1598, 4
        %v1612 = vsel %vm961, %v1611, %v1592
        %v1613 = vrot.slane %v1592, 4
        %v1614 = vsel %vm961, %v1598, %v1613
        %v1616 = vunpack.c.l.s4 1934713408
        %v1617 = vunpack.c.0.s8 %v1616
        %v1618 = vperm.slane %v1612, %v1617
        %v1620 = vunpack.c.l.s4 1934713408
        %v1621 = vunpack.c.0.s8 %v1620
        %v1622 = vperm.slane %v1614, %v1621
        %v1623 = vrot.slane %v1618, 4
        %v1624 = vsel %vm961, %v1623, %v1606
        %v1625 = vrot.slane %v1606, 4
        %v1626 = vsel %vm961, %v1618, %v1625
        %v1627 = vrot.slane %v1622, 4
        %v1628 = vsel %vm961, %v1627, %v1610
        %v1629 = vrot.slane %v1610, 4
        %v1630 = vsel %vm961, %v1622, %v1629
        %v1631 = vsel %vm961, %v1571, %v1552
        %v1633 = vunpack.c.l.s4 1983009808
        %v1634 = vunpack.c.0.s8 %v1633
        %v1635 = vperm.slane %v1631, %v1634
        %v1636 = vrot.slane %v1572, 4
        %v1637 = vsel %vm961, %v1636, %v1570
        %v1639 = vunpack.c.l.s4 1983009808
        %v1640 = vunpack.c.0.s8 %v1639
        %v1641 = vperm.slane %v1637, %v1640
        %v1642 = vsel %vm961, %v1575, %v1564
        %v1644 = vunpack.c.l.s4 1983009808
        %v1645 = vunpack.c.0.s8 %v1644
        %v1646 = vperm.slane %v1642, %v1645
        %v1647 = vrot.slane %v1576, 4
        %v1648 = vsel %vm961, %v1647, %v1574
        %v1650 = vunpack.c.l.s4 1983009808
        %v1651 = vunpack.c.0.s8 %v1650
        %v1652 = vperm.slane %v1648, %v1651
        %v1653 = vrot.slane %v1641, 4
        %v1654 = vsel %vm961, %v1653, %v1635
        %v1655 = vrot.slane %v1635, 4
        %v1656 = vsel %vm961, %v1641, %v1655
        %v1658 = vunpack.c.l.s4 1934713408
        %v1659 = vunpack.c.0.s8 %v1658
        %v1660 = vperm.slane %v1654, %v1659
        %v1662 = vunpack.c.l.s4 1934713408
        %v1663 = vunpack.c.0.s8 %v1662
        %v1664 = vperm.slane %v1656, %v1663
        %v1665 = vrot.slane %v1652, 4
        %v1666 = vsel %vm961, %v1665, %v1646
        %v1667 = vrot.slane %v1646, 4
        %v1668 = vsel %vm961, %v1652, %v1667
        %v1670 = vunpack.c.l.s4 1934713408
        %v1671 = vunpack.c.0.s8 %v1670
        %v1672 = vperm.slane %v1666, %v1671
        %v1674 = vunpack.c.l.s4 1934713408
        %v1675 = vunpack.c.0.s8 %v1674
        %v1676 = vperm.slane %v1668, %v1675
        %v1677 = vrot.slane %v1672, 4
        %v1678 = vsel %vm961, %v1677, %v1660
        %v1679 = vrot.slane %v1660, 4
        %v1680 = vsel %vm961, %v1672, %v1679
        %v1681 = vrot.slane %v1676, 4
        %v1682 = vsel %vm961, %v1681, %v1664
        %v1683 = vrot.slane %v1664, 4
        %v1684 = vsel %vm961, %v1676, %v1683
        %v1685 = vpack.c.bf16 %v1624, %v1624
        %v1686 = vpack.c.bf16 %v1626, %v1626
        %v1687 = vpack.c.bf16 %v1628, %v1628
        %v1688 = vpack.c.bf16 %v1630, %v1630
        %v1689 = vpack.c.bf16 %v1678, %v1678
        %v1690 = vpack.c.bf16 %v1680, %v1680
        %v1691 = vpack.c.bf16 %v1682, %v1682
        %v1692 = vpack.c.bf16 %v1684, %v1684
        %vm1693 = vcmask 64512
        %v1695 = vsel %vm1693, %v1181, 0
        %v1698 = vsel %vm1693, %v1433, 0
        %1700 = vmatpush.bf16.xpose.msra.mxu0 0
        %1701 = vmatpush.bf16.xpose.msra.mxu0 0
        %1702 = vmatpush.bf16.xpose.msra.mxu0 0
        %1703 = vmatpush.bf16.xpose.msra.mxu0 0
        %1704 = vmatpush.bf16.xpose.msra.mxu0 0
        %1705 = vmatpush.bf16.xpose.msra.mxu0 0
        %1706 = vmatpush.bf16.xpose.msra.mxu0 0
        %1707 = vmatpush.bf16.xpose.msra.mxu0 %v1698
        %1708 = vmatmul.bf16.gmra.mxu0 %v1695
        %v1709 = vpop.f32.mrf.mxu0
        %v1710 = vadd.f32 0.0, %v1709
        %v1711 = vpop.f32.mrf.mxu0
        %1712 = vdwg.mxu0
        %v1714 = vsel %vm1693, %v1182, 0
        %v1717 = vsel %vm1693, %v1434, 0
        %1719 = vmatpush.bf16.xpose.msra.mxu0 0
        %1720 = vmatpush.bf16.xpose.msra.mxu0 0
        %1721 = vmatpush.bf16.xpose.msra.mxu0 0
        %1722 = vmatpush.bf16.xpose.msra.mxu0 0
        %1723 = vmatpush.bf16.xpose.msra.mxu0 0
        %1724 = vmatpush.bf16.xpose.msra.mxu0 0
        %1725 = vmatpush.bf16.xpose.msra.mxu0 0
        %1726 = vmatpush.bf16.xpose.msra.mxu0 %v1717
        %1727 = vmatmul.bf16.gmra.mxu0 %v1714
        %v1728 = vpop.f32.mrf.mxu0
        %v1729 = vadd.f32 0.0, %v1728
        %v1730 = vpop.f32.mrf.mxu0
        %1731 = vdwg.mxu0
        %v1733 = vsel %vm1693, %v1183, 0
        %v1736 = vsel %vm1693, %v1435, 0
        %1738 = vmatpush.bf16.xpose.msra.mxu0 0
        %1739 = vmatpush.bf16.xpose.msra.mxu0 0
        %1740 = vmatpush.bf16.xpose.msra.mxu0 0
        %1741 = vmatpush.bf16.xpose.msra.mxu0 0
        %1742 = vmatpush.bf16.xpose.msra.mxu0 0
        %1743 = vmatpush.bf16.xpose.msra.mxu0 0
        %1744 = vmatpush.bf16.xpose.msra.mxu0 0
        %1745 = vmatpush.bf16.xpose.msra.mxu0 %v1736
        %1746 = vmatmul.bf16.gmra.mxu0 %v1733
        %v1747 = vpop.f32.mrf.mxu0
        %v1748 = vadd.f32 0.0, %v1747
        %v1749 = vpop.f32.mrf.mxu0
        %1750 = vdwg.mxu0
        %v1752 = vsel %vm1693, %v1184, 0
        %v1755 = vsel %vm1693, %v1436, 0
        %1757 = vmatpush.bf16.xpose.msra.mxu0 0
        %1758 = vmatpush.bf16.xpose.msra.mxu0 0
        %1759 = vmatpush.bf16.xpose.msra.mxu0 0
        %1760 = vmatpush.bf16.xpose.msra.mxu0 0
        %1761 = vmatpush.bf16.xpose.msra.mxu0 0
        %1762 = vmatpush.bf16.xpose.msra.mxu0 0
        %1763 = vmatpush.bf16.xpose.msra.mxu0 0
        %1764 = vmatpush.bf16.xpose.msra.mxu0 %v1755
        %1765 = vmatmul.bf16.gmra.mxu0 %v1752
        %v1766 = vpop.f32.mrf.mxu0
        %v1767 = vadd.f32 0.0, %v1766
        %v1768 = vpop.f32.mrf.mxu0
        %1769 = vdwg.mxu0
        %v1771 = vsel %vm1693, %v1185, 0
        %v1774 = vsel %vm1693, %v1437, 0
        %1776 = vmatpush.bf16.xpose.msra.mxu0 0
        %1777 = vmatpush.bf16.xpose.msra.mxu0 0
        %1778 = vmatpush.bf16.xpose.msra.mxu0 0
        %1779 = vmatpush.bf16.xpose.msra.mxu0 0
        %1780 = vmatpush.bf16.xpose.msra.mxu0 0
        %1781 = vmatpush.bf16.xpose.msra.mxu0 0
        %1782 = vmatpush.bf16.xpose.msra.mxu0 0
        %1783 = vmatpush.bf16.xpose.msra.mxu0 %v1774
        %1784 = vmatmul.bf16.gmra.mxu0 %v1771
        %v1785 = vpop.f32.mrf.mxu0
        %v1786 = vadd.f32 0.0, %v1785
        %v1787 = vpop.f32.mrf.mxu0
        %1788 = vdwg.mxu0
        %v1790 = vsel %vm1693, %v1186, 0
        %v1793 = vsel %vm1693, %v1438, 0
        %1795 = vmatpush.bf16.xpose.msra.mxu0 0
        %1796 = vmatpush.bf16.xpose.msra.mxu0 0
        %1797 = vmatpush.bf16.xpose.msra.mxu0 0
        %1798 = vmatpush.bf16.xpose.msra.mxu0 0
        %1799 = vmatpush.bf16.xpose.msra.mxu0 0
        %1800 = vmatpush.bf16.xpose.msra.mxu0 0
        %1801 = vmatpush.bf16.xpose.msra.mxu0 0
        %1802 = vmatpush.bf16.xpose.msra.mxu0 %v1793
        %1803 = vmatmul.bf16.gmra.mxu0 %v1790
        %v1804 = vpop.f32.mrf.mxu0
        %v1805 = vadd.f32 0.0, %v1804
        %v1806 = vpop.f32.mrf.mxu0
        %1807 = vdwg.mxu0
        %v1809 = vsel %vm1693, %v1187, 0
        %v1812 = vsel %vm1693, %v1439, 0
        %1814 = vmatpush.bf16.xpose.msra.mxu0 0
        %1815 = vmatpush.bf16.xpose.msra.mxu0 0
        %1816 = vmatpush.bf16.xpose.msra.mxu0 0
        %1817 = vmatpush.bf16.xpose.msra.mxu0 0
        %1818 = vmatpush.bf16.xpose.msra.mxu0 0
        %1819 = vmatpush.bf16.xpose.msra.mxu0 0
        %1820 = vmatpush.bf16.xpose.msra.mxu0 0
        %1821 = vmatpush.bf16.xpose.msra.mxu0 %v1812
        %1822 = vmatmul.bf16.gmra.mxu0 %v1809
        %v1823 = vpop.f32.mrf.mxu0
        %v1824 = vadd.f32 0.0, %v1823
        %v1825 = vpop.f32.mrf.mxu0
        %1826 = vdwg.mxu0
        %v1828 = vsel %vm1693, %v1188, 0
        %v1831 = vsel %vm1693, %v1440, 0
        %1833 = vmatpush.bf16.xpose.msra.mxu0 0
        %1834 = vmatpush.bf16.xpose.msra.mxu0 0
        %1835 = vmatpush.bf16.xpose.msra.mxu0 0
        %1836 = vmatpush.bf16.xpose.msra.mxu0 0
        %1837 = vmatpush.bf16.xpose.msra.mxu0 0
        %1838 = vmatpush.bf16.xpose.msra.mxu0 0
        %1839 = vmatpush.bf16.xpose.msra.mxu0 0
        %1840 = vmatpush.bf16.xpose.msra.mxu0 %v1831
        %1841 = vmatmul.bf16.gmra.mxu0 %v1828
        %v1842 = vpop.f32.mrf.mxu0
        %v1843 = vadd.f32 0.0, %v1842
        %v1844 = vpop.f32.mrf.mxu0
        %1845 = vdwg.mxu0
        %v1846 = vmul.f32 %v1710, 0.35355338
        %v1847 = vmul.f32 %v1729, 0.35355338
        %v1848 = vmul.f32 %v1748, 0.35355338
        %v1849 = vmul.f32 %v1767, 0.35355338
        %v1850 = vmul.f32 %v1786, 0.35355338
        %v1851 = vmul.f32 %v1805, 0.35355338
        %v1852 = vmul.f32 %v1824, 0.35355338
        %v1853 = vmul.f32 %v1843, 0.35355338
        %v1854 = vld [vmem:[#allocation6] sm:$0x1]
        %v1855 = vld [vmem:[#allocation6 + $0x1] sm:$0x1]
        %v1858 = vperm.slane %v1854, 0
        %v1859 = vperm.slane %v1855, 0
        %v1862 = vadd.f32 %v1846, %v1858
        %v1863 = vadd.f32 %v1847, %v1858
        %v1864 = vadd.f32 %v1848, %v1858
        %v1865 = vadd.f32 %v1849, %v1858
        %v1866 = vadd.f32 %v1850, %v1859
        %v1867 = vadd.f32 %v1851, %v1859
        %v1868 = vadd.f32 %v1852, %v1859
        %v1869 = vadd.f32 %v1853, %v1859
        %v1870 = vsel %vm1693, %v1862, -inf
        %1871 = vmax.xlane.f32.xlu0 %v1870
        %v1872 = vpop.xlane.xlu0 %1871
        %v1873 = vsel %vm1693, %v1863, -inf
        %1874 = vmax.xlane.f32.xlu0 %v1873
        %v1875 = vpop.xlane.xlu0 %1874
        %v1876 = vsel %vm1693, %v1864, -inf
        %1877 = vmax.xlane.f32.xlu0 %v1876
        %v1878 = vpop.xlane.xlu0 %1877
        %v1879 = vsel %vm1693, %v1865, -inf
        %1880 = vmax.xlane.f32.xlu0 %v1879
        %v1881 = vpop.xlane.xlu0 %1880
        %v1882 = vsel %vm1693, %v1866, -inf
        %1883 = vmax.xlane.f32.xlu0 %v1882
        %v1884 = vpop.xlane.xlu0 %1883
        %v1885 = vsel %vm1693, %v1867, -inf
        %1886 = vmax.xlane.f32.xlu0 %v1885
        %v1887 = vpop.xlane.xlu0 %1886
        %v1888 = vsel %vm1693, %v1868, -inf
        %1889 = vmax.xlane.f32.xlu0 %v1888
        %v1890 = vpop.xlane.xlu0 %1889
        %v1891 = vsel %vm1693, %v1869, -inf
        %1892 = vmax.xlane.f32.xlu0 %v1891
        %v1893 = vpop.xlane.xlu0 %1892
        %v1894 = vsub.f32 %v1862, %v1872
        %v1895 = vsub.f32 %v1863, %v1875
        %v1896 = vsub.f32 %v1864, %v1878
        %v1897 = vsub.f32 %v1865, %v1881
        %v1898 = vsub.f32 %v1866, %v1884
        %v1899 = vsub.f32 %v1867, %v1887
        %v1900 = vsub.f32 %v1868, %v1890
        %v1901 = vsub.f32 %v1869, %v1893
        %v1902 = vmul.f32 %v1894, 1.442695
        %v1903 = vpow.pop %v1902
        %v1904 = vmul.f32 %v1895, 1.442695
        %v1905 = vpow.pop %v1904
        %v1906 = vmul.f32 %v1896, 1.442695
        %v1907 = vpow.pop %v1906
        %v1908 = vmul.f32 %v1897, 1.442695
        %v1909 = vpow.pop %v1908
        %v1910 = vmul.f32 %v1898, 1.442695
        %v1911 = vpow.pop %v1910
        %v1912 = vmul.f32 %v1899, 1.442695
        %v1913 = vpow.pop %v1912
        %v1914 = vmul.f32 %v1900, 1.442695
        %v1915 = vpow.pop %v1914
        %v1916 = vmul.f32 %v1901, 1.442695
        %v1917 = vpow.pop %v1916
        %v1918 = vsel %vm1693, %v1903, 0.0
        %1919 = vadd.xlane.f32.xlu0 %v1918
        %v1920 = vpop.xlane.xlu0 %1919
        %v1921 = vsel %vm1693, %v1905, 0.0
        %1922 = vadd.xlane.f32.xlu0 %v1921
        %v1923 = vpop.xlane.xlu0 %1922
        %v1924 = vsel %vm1693, %v1907, 0.0
        %1925 = vadd.xlane.f32.xlu0 %v1924
        %v1926 = vpop.xlane.xlu0 %1925
        %v1927 = vsel %vm1693, %v1909, 0.0
        %1928 = vadd.xlane.f32.xlu0 %v1927
        %v1929 = vpop.xlane.xlu0 %1928
        %v1930 = vsel %vm1693, %v1911, 0.0
        %1931 = vadd.xlane.f32.xlu0 %v1930
        %v1932 = vpop.xlane.xlu0 %1931
        %v1933 = vsel %vm1693, %v1913, 0.0
        %1934 = vadd.xlane.f32.xlu0 %v1933
        %v1935 = vpop.xlane.xlu0 %1934
        %v1936 = vsel %vm1693, %v1915, 0.0
        %1937 = vadd.xlane.f32.xlu0 %v1936
        %v1938 = vpop.xlane.xlu0 %1937
        %v1939 = vsel %vm1693, %v1917, 0.0
        %1940 = vadd.xlane.f32.xlu0 %v1939
        %v1941 = vpop.xlane.xlu0 %1940
        %v1942 = vrcp.pop %v1920
        %v1943 = vrcp.pop %v1923
        %v1944 = vrcp.pop %v1926
        %v1945 = vrcp.pop %v1929
        %v1946 = vrcp.pop %v1932
        %v1947 = vrcp.pop %v1935
        %v1948 = vrcp.pop %v1938
        %v1949 = vrcp.pop %v1941
        %v1950 = vmul.f32 %v1903, %v1942
        %v1951 = vmul.f32 %v1905, %v1943
        %v1952 = vmul.f32 %v1907, %v1944
        %v1953 = vmul.f32 %v1909, %v1945
        %v1954 = vmul.f32 %v1911, %v1946
        %v1955 = vmul.f32 %v1913, %v1947
        %v1956 = vmul.f32 %v1915, %v1948
        %v1957 = vmul.f32 %v1917, %v1949
        %1958 = vst.msk [vmem:[%s812] sm:$0xff] %vm1693, %v1950
        %1959 = vst.msk [vmem:[%s812 + $0x8] sm:$0xff] %vm1693, %v1951
        %1960 = vst.msk [vmem:[%s812 + $0x10] sm:$0xff] %vm1693, %v1952
        %1961 = vst.msk [vmem:[%s812 + $0x18] sm:$0xff] %vm1693, %v1953
        %1962 = vst.msk [vmem:[%s812 + $0x20] sm:$0xff] %vm1693, %v1954
        %1963 = vst.msk [vmem:[%s812 + $0x28] sm:$0xff] %vm1693, %v1955
        %1964 = vst.msk [vmem:[%s812 + $0x30] sm:$0xff] %vm1693, %v1956
        %1965 = vst.msk [vmem:[%s812 + $0x38] sm:$0xff] %vm1693, %v1957
        %v1966 = vpack.c.bf16 %v1950, %v1950
        %v1967 = vpack.c.bf16 %v1951, %v1951
        %v1968 = vpack.c.bf16 %v1952, %v1952
        %v1969 = vpack.c.bf16 %v1953, %v1953
        %v1970 = vpack.c.bf16 %v1954, %v1954
        %v1971 = vpack.c.bf16 %v1955, %v1955
        %v1972 = vpack.c.bf16 %v1956, %v1956
        %v1973 = vpack.c.bf16 %v1957, %v1957
        %v1975 = vsel %vm1693, %v1966, 0
        %vm1977 = vcmask 1043456
        %v1979 = vsel %vm1977, %v1685, 0
        %1981 = vmatpush.bf16.msra.mxu0 0
        %1982 = vmatpush.bf16.msra.mxu0 0
        %1983 = vmatpush.bf16.msra.mxu0 0
        %1984 = vmatpush.bf16.msra.mxu0 0
        %1985 = vmatpush.bf16.msra.mxu0 0
        %1986 = vmatpush.bf16.msra.mxu0 0
        %1987 = vmatpush.bf16.msra.mxu0 0
        %1988 = vmatpush.bf16.msra.mxu0 %v1979
        %1989 = vmatmul.bf16.gmra.mxu0 %v1975
        %v1990 = vpop.f32.mrf.mxu0
        %v1991 = vadd.f32 0.0, %v1990
        %v1992 = vpop.f32.mrf.mxu0
        %1993 = vdwg.mxu0
        %v1995 = vsel %vm1693, %v1967, 0
        %v1998 = vsel %vm1977, %v1686, 0
        %2000 = vmatpush.bf16.msra.mxu0 0
        %2001 = vmatpush.bf16.msra.mxu0 0
        %2002 = vmatpush.bf16.msra.mxu0 0
        %2003 = vmatpush.bf16.msra.mxu0 0
        %2004 = vmatpush.bf16.msra.mxu0 0
        %2005 = vmatpush.bf16.msra.mxu0 0
        %2006 = vmatpush.bf16.msra.mxu0 0
        %2007 = vmatpush.bf16.msra.mxu0 %v1998
        %2008 = vmatmul.bf16.gmra.mxu0 %v1995
        %v2009 = vpop.f32.mrf.mxu0
        %v2010 = vadd.f32 0.0, %v2009
        %v2011 = vpop.f32.mrf.mxu0
        %2012 = vdwg.mxu0
        %v2014 = vsel %vm1693, %v1968, 0
        %v2017 = vsel %vm1977, %v1687, 0
        %2019 = vmatpush.bf16.msra.mxu0 0
        %2020 = vmatpush.bf16.msra.mxu0 0
        %2021 = vmatpush.bf16.msra.mxu0 0
        %2022 = vmatpush.bf16.msra.mxu0 0
        %2023 = vmatpush.bf16.msra.mxu0 0
        %2024 = vmatpush.bf16.msra.mxu0 0
        %2025 = vmatpush.bf16.msra.mxu0 0
        %2026 = vmatpush.bf16.msra.mxu0 %v2017
        %2027 = vmatmul.bf16.gmra.mxu0 %v2014
        %v2028 = vpop.f32.mrf.mxu0
        %v2029 = vadd.f32 0.0, %v2028
        %v2030 = vpop.f32.mrf.mxu0
        %2031 = vdwg.mxu0
        %v2033 = vsel %vm1693, %v1969, 0
        %v2036 = vsel %vm1977, %v1688, 0
        %2038 = vmatpush.bf16.msra.mxu0 0
        %2039 = vmatpush.bf16.msra.mxu0 0
        %2040 = vmatpush.bf16.msra.mxu0 0
        %2041 = vmatpush.bf16.msra.mxu0 0
        %2042 = vmatpush.bf16.msra.mxu0 0
        %2043 = vmatpush.bf16.msra.mxu0 0
        %2044 = vmatpush.bf16.msra.mxu0 0
        %2045 = vmatpush.bf16.msra.mxu0 %v2036
        %2046 = vmatmul.bf16.gmra.mxu0 %v2033
        %v2047 = vpop.f32.mrf.mxu0
        %v2048 = vadd.f32 0.0, %v2047
        %v2049 = vpop.f32.mrf.mxu0
        %2050 = vdwg.mxu0
        %v2052 = vsel %vm1693, %v1970, 0
        %v2055 = vsel %vm1977, %v1689, 0
        %2057 = vmatpush.bf16.msra.mxu0 0
        %2058 = vmatpush.bf16.msra.mxu0 0
        %2059 = vmatpush.bf16.msra.mxu0 0
        %2060 = vmatpush.bf16.msra.mxu0 0
        %2061 = vmatpush.bf16.msra.mxu0 0
        %2062 = vmatpush.bf16.msra.mxu0 0
        %2063 = vmatpush.bf16.msra.mxu0 0
        %2064 = vmatpush.bf16.msra.mxu0 %v2055
        %2065 = vmatmul.bf16.gmra.mxu0 %v2052
        %v2066 = vpop.f32.mrf.mxu0
        %v2067 = vadd.f32 0.0, %v2066
        %v2068 = vpop.f32.mrf.mxu0
        %2069 = vdwg.mxu0
        %v2071 = vsel %vm1693, %v1971, 0
        %v2074 = vsel %vm1977, %v1690, 0
        %2076 = vmatpush.bf16.msra.mxu0 0
        %2077 = vmatpush.bf16.msra.mxu0 0
        %2078 = vmatpush.bf16.msra.mxu0 0
        %2079 = vmatpush.bf16.msra.mxu0 0
        %2080 = vmatpush.bf16.msra.mxu0 0
        %2081 = vmatpush.bf16.msra.mxu0 0
        %2082 = vmatpush.bf16.msra.mxu0 0
        %2083 = vmatpush.bf16.msra.mxu0 %v2074
        %2084 = vmatmul.bf16.gmra.mxu0 %v2071
        %v2085 = vpop.f32.mrf.mxu0
        %v2086 = vadd.f32 0.0, %v2085
        %v2087 = vpop.f32.mrf.mxu0
        %2088 = vdwg.mxu0
        %v2090 = vsel %vm1693, %v1972, 0
        %v2093 = vsel %vm1977, %v1691, 0
        %2095 = vmatpush.bf16.msra.mxu0 0
        %2096 = vmatpush.bf16.msra.mxu0 0
        %2097 = vmatpush.bf16.msra.mxu0 0
        %2098 = vmatpush.bf16.msra.mxu0 0
        %2099 = vmatpush.bf16.msra.mxu0 0
        %2100 = vmatpush.bf16.msra.mxu0 0
        %2101 = vmatpush.bf16.msra.mxu0 0
        %2102 = vmatpush.bf16.msra.mxu0 %v2093
        %2103 = vmatmul.bf16.gmra.mxu0 %v2090
        %v2104 = vpop.f32.mrf.mxu0
        %v2105 = vadd.f32 0.0, %v2104
        %v2106 = vpop.f32.mrf.mxu0
        %2107 = vdwg.mxu0
        %v2109 = vsel %vm1693, %v1973, 0
        %v2112 = vsel %vm1977, %v1692, 0
        %2114 = vmatpush.bf16.msra.mxu0 0
        %2115 = vmatpush.bf16.msra.mxu0 0
        %2116 = vmatpush.bf16.msra.mxu0 0
        %2117 = vmatpush.bf16.msra.mxu0 0
        %2118 = vmatpush.bf16.msra.mxu0 0
        %2119 = vmatpush.bf16.msra.mxu0 0
        %2120 = vmatpush.bf16.msra.mxu0 0
        %2121 = vmatpush.bf16.msra.mxu0 %v2112
        %2122 = vmatmul.bf16.gmra.mxu0 %v2109
        %v2123 = vpop.f32.mrf.mxu0
        %v2124 = vadd.f32 0.0, %v2123
        %v2125 = vpop.f32.mrf.mxu0
        %2126 = vdwg.mxu0
        %v2127 = vrot.slane %v2029, 4
        %v2128 = vsel %vm961, %v2127, %v1991
        %v2129 = vrot.slane %v1991, 4
        %v2130 = vsel %vm961, %v2029, %v2129
        %v2132 = vunpack.c.l.s4 1983009808
        %v2133 = vunpack.c.0.s8 %v2132
        %v2134 = vperm.slane %v2128, %v2133
        %v2136 = vunpack.c.l.s4 1983009808
        %v2137 = vunpack.c.0.s8 %v2136
        %v2138 = vperm.slane %v2130, %v2137
        %v2139 = vrot.slane %v2048, 4
        %v2140 = vsel %vm961, %v2139, %v2010
        %v2141 = vrot.slane %v2010, 4
        %v2142 = vsel %vm961, %v2048, %v2141
        %v2144 = vunpack.c.l.s4 1983009808
        %v2145 = vunpack.c.0.s8 %v2144
        %v2146 = vperm.slane %v2140, %v2145
        %v2148 = vunpack.c.l.s4 1983009808
        %v2149 = vunpack.c.0.s8 %v2148
        %v2150 = vperm.slane %v2142, %v2149
        %v2151 = vrot.slane %v2146, 4
        %v2152 = vsel %vm961, %v2151, %v2134
        %v2153 = vrot.slane %v2134, 4
        %v2154 = vsel %vm961, %v2146, %v2153
        %v2156 = vunpack.c.l.s4 1934713408
        %v2157 = vunpack.c.0.s8 %v2156
        %v2158 = vperm.slane %v2152, %v2157
        %v2160 = vunpack.c.l.s4 1934713408
        %v2161 = vunpack.c.0.s8 %v2160
        %v2162 = vperm.slane %v2154, %v2161
        %v2163 = vrot.slane %v2150, 4
        %v2164 = vsel %vm961, %v2163, %v2138
        %v2165 = vrot.slane %v2138, 4
        %v2166 = vsel %vm961, %v2150, %v2165
        %v2168 = vunpack.c.l.s4 1934713408
        %v2169 = vunpack.c.0.s8 %v2168
        %v2170 = vperm.slane %v2164, %v2169
        %v2172 = vunpack.c.l.s4 1934713408
        %v2173 = vunpack.c.0.s8 %v2172
        %v2174 = vperm.slane %v2166, %v2173
        %v2175 = vrot.slane %v2158, 4
        %v2176 = vsel %vm961, 0.0, %v2175
        %v2177 = vrot.slane %v2162, 4
        %v2178 = vsel %vm961, 0.0, %v2177
        %v2179 = vrot.slane %v2170, 4
        %v2180 = vsel %vm961, 0.0, %v2179
        %v2181 = vrot.slane %v2174, 4
        %v2182 = vsel %vm961, 0.0, %v2181
        %v2183 = vrot.slane %v2105, 4
        %v2184 = vsel %vm961, %v2183, %v2067
        %v2185 = vrot.slane %v2067, 4
        %v2186 = vsel %vm961, %v2105, %v2185
        %v2188 = vunpack.c.l.s4 1983009808
        %v2189 = vunpack.c.0.s8 %v2188
        %v2190 = vperm.slane %v2184, %v2189
        %v2192 = vunpack.c.l.s4 1983009808
        %v2193 = vunpack.c.0.s8 %v2192
        %v2194 = vperm.slane %v2186, %v2193
        %v2195 = vrot.slane %v2124, 4
        %v2196 = vsel %vm961, %v2195, %v2086
        %v2197 = vrot.slane %v2086, 4
        %v2198 = vsel %vm961, %v2124, %v2197
        %v2200 = vunpack.c.l.s4 1983009808
        %v2201 = vunpack.c.0.s8 %v2200
        %v2202 = vperm.slane %v2196, %v2201
        %v2204 = vunpack.c.l.s4 1983009808
        %v2205 = vunpack.c.0.s8 %v2204
        %v2206 = vperm.slane %v2198, %v2205
        %v2207 = vrot.slane %v2202, 4
        %v2208 = vsel %vm961, %v2207, %v2190
        %v2209 = vrot.slane %v2190, 4
        %v2210 = vsel %vm961, %v2202, %v2209
        %v2212 = vunpack.c.l.s4 1934713408
        %v2213 = vunpack.c.0.s8 %v2212
        %v2214 = vperm.slane %v2208, %v2213
        %v2216 = vunpack.c.l.s4 1934713408
        %v2217 = vunpack.c.0.s8 %v2216
        %v2218 = vperm.slane %v2210, %v2217
        %v2219 = vrot.slane %v2206, 4
        %v2220 = vsel %vm961, %v2219, %v2194
        %v2221 = vrot.slane %v2194, 4
        %v2222 = vsel %vm961, %v2206, %v2221
        %v2224 = vunpack.c.l.s4 1934713408
        %v2225 = vunpack.c.0.s8 %v2224
        %v2226 = vperm.slane %v2220, %v2225
        %v2228 = vunpack.c.l.s4 1934713408
        %v2229 = vunpack.c.0.s8 %v2228
        %v2230 = vperm.slane %v2222, %v2229
        %v2231 = vrot.slane %v2214, 4
        %v2232 = vsel %vm961, 0.0, %v2231
        %v2233 = vrot.slane %v2218, 4
        %v2234 = vsel %vm961, 0.0, %v2233
        %v2235 = vrot.slane %v2226, 4
        %v2236 = vsel %vm961, 0.0, %v2235
        %v2237 = vrot.slane %v2230, 4
        %v2238 = vsel %vm961, 0.0, %v2237
        %v2239 = vsel %vm961, %v2177, %v2158
        %v2241 = vunpack.c.l.s4 1983009808
        %v2242 = vunpack.c.0.s8 %v2241
        %v2243 = vperm.slane %v2239, %v2242
        %v2244 = vrot.slane %v2178, 4
        %v2245 = vsel %vm961, %v2244, %v2176
        %v2247 = vunpack.c.l.s4 1983009808
        %v2248 = vunpack.c.0.s8 %v2247
        %v2249 = vperm.slane %v2245, %v2248
        %v2250 = vsel %vm961, %v2181, %v2170
        %v2252 = vunpack.c.l.s4 1983009808
        %v2253 = vunpack.c.0.s8 %v2252
        %v2254 = vperm.slane %v2250, %v2253
        %v2255 = vrot.slane %v2182, 4
        %v2256 = vsel %vm961, %v2255, %v2180
        %v2258 = vunpack.c.l.s4 1983009808
        %v2259 = vunpack.c.0.s8 %v2258
        %v2260 = vperm.slane %v2256, %v2259
        %v2261 = vrot.slane %v2249, 4
        %v2262 = vsel %vm961, %v2261, %v2243
        %v2263 = vrot.slane %v2243, 4
        %v2264 = vsel %vm961, %v2249, %v2263
        %v2266 = vunpack.c.l.s4 1934713408
        %v2267 = vunpack.c.0.s8 %v2266
        %v2268 = vperm.slane %v2262, %v2267
        %v2270 = vunpack.c.l.s4 1934713408
        %v2271 = vunpack.c.0.s8 %v2270
        %v2272 = vperm.slane %v2264, %v2271
        %v2273 = vrot.slane %v2260, 4
        %v2274 = vsel %vm961, %v2273, %v2254
        %v2275 = vrot.slane %v2254, 4
        %v2276 = vsel %vm961, %v2260, %v2275
        %v2278 = vunpack.c.l.s4 1934713408
        %v2279 = vunpack.c.0.s8 %v2278
        %v2280 = vperm.slane %v2274, %v2279
        %v2282 = vunpack.c.l.s4 1934713408
        %v2283 = vunpack.c.0.s8 %v2282
        %v2284 = vperm.slane %v2276, %v2283
        %v2285 = vrot.slane %v2280, 4
        %v2286 = vsel %vm961, %v2285, %v2268
        %v2287 = vrot.slane %v2268, 4
        %v2288 = vsel %vm961, %v2280, %v2287
        %v2289 = vrot.slane %v2284, 4
        %v2290 = vsel %vm961, %v2289, %v2272
        %v2291 = vrot.slane %v2272, 4
        %v2292 = vsel %vm961, %v2284, %v2291
        %v2293 = vsel %vm961, %v2233, %v2214
        %v2295 = vunpack.c.l.s4 1983009808
        %v2296 = vunpack.c.0.s8 %v2295
        %v2297 = vperm.slane %v2293, %v2296
        %v2298 = vrot.slane %v2234, 4
        %v2299 = vsel %vm961, %v2298, %v2232
        %v2301 = vunpack.c.l.s4 1983009808
        %v2302 = vunpack.c.0.s8 %v2301
        %v2303 = vperm.slane %v2299, %v2302
        %v2304 = vsel %vm961, %v2237, %v2226
        %v2306 = vunpack.c.l.s4 1983009808
        %v2307 = vunpack.c.0.s8 %v2306
        %v2308 = vperm.slane %v2304, %v2307
        %v2309 = vrot.slane %v2238, 4
        %v2310 = vsel %vm961, %v2309, %v2236
        %v2312 = vunpack.c.l.s4 1983009808
        %v2313 = vunpack.c.0.s8 %v2312
        %v2314 = vperm.slane %v2310, %v2313
        %v2315 = vrot.slane %v2303, 4
        %v2316 = vsel %vm961, %v2315, %v2297
        %v2317 = vrot.slane %v2297, 4
        %v2318 = vsel %vm961, %v2303, %v2317
        %v2320 = vunpack.c.l.s4 1934713408
        %v2321 = vunpack.c.0.s8 %v2320
        %v2322 = vperm.slane %v2316, %v2321
        %v2324 = vunpack.c.l.s4 1934713408
        %v2325 = vunpack.c.0.s8 %v2324
        %v2326 = vperm.slane %v2318, %v2325
        %v2327 = vrot.slane %v2314, 4
        %v2328 = vsel %vm961, %v2327, %v2308
        %v2329 = vrot.slane %v2308, 4
        %v2330 = vsel %vm961, %v2314, %v2329
        %v2332 = vunpack.c.l.s4 1934713408
        %v2333 = vunpack.c.0.s8 %v2332
        %v2334 = vperm.slane %v2328, %v2333
        %v2336 = vunpack.c.l.s4 1934713408
        %v2337 = vunpack.c.0.s8 %v2336
        %v2338 = vperm.slane %v2330, %v2337
        %v2339 = vrot.slane %v2334, 4
        %v2340 = vsel %vm961, %v2339, %v2322
        %v2341 = vrot.slane %v2322, 4
        %v2342 = vsel %vm961, %v2334, %v2341
        %v2343 = vrot.slane %v2338, 4
        %v2344 = vsel %vm961, %v2343, %v2326
        %v2345 = vrot.slane %v2326, 4
        %v2346 = vsel %vm961, %v2338, %v2345
        %2349 = vrot.lane.b32.xlu0 %v2288, 8
        %v2350 = vpop.permute.xlu0 %2349
        %2351 = vrot.lane.b32.xlu0 %v2342, 8
        %v2352 = vpop.permute.xlu0 %2351
        %2357 = vrot.lane.b32.xlu0 %v2290, 16
        %v2358 = vpop.permute.xlu0 %2357
        %2359 = vrot.lane.b32.xlu0 %v2344, 16
        %v2360 = vpop.permute.xlu0 %2359
        %2365 = vrot.lane.b32.xlu0 %v2292, 24
        %v2366 = vpop.permute.xlu0 %2365
        %2367 = vrot.lane.b32.xlu0 %v2346, 24
        %v2368 = vpop.permute.xlu0 %2367
        %v2371 = vsel %vm1693, %v2286, %v2350
        %v2372 = vsel %vm1693, %v2340, %v2352
        %vm2373 = vcmask 130048
        %v2374 = vsel %vm2373, %v2371, %v2358
        %v2375 = vsel %vm2373, %v2372, %v2360
        %vm2376 = vcmask 195584
        %v2377 = vsel %vm2376, %v2374, %v2366
        %v2378 = vsel %vm2376, %v2375, %v2368
        %v2379 = vpack.c.bf16 %v2378, %v2377
        %v2380 = vld [vmem:[%s827] sm:$0xf]
        %v2381 = vld [vmem:[%s827 + $0x4] sm:$0xf]
        %v2382 = vld [vmem:[%s827 + $0x8] sm:$0xf]
        %v2383 = vld [vmem:[%s827 + $0xc] sm:$0xf]
        %v2384 = vld [vmem:[%s830] sm:$0x1]
        %v2386 = vperm.slane %v2384, 0
        %v2392 = vunpack.c.l.b16 %v2380
        %v2393 = vunpack.c.l.b16 %v2381
        %v2394 = vunpack.c.l.b16 %v2382
        %v2395 = vunpack.c.l.b16 %v2383
        %v2396 = vpack.c.b16 %v2393, %v2392
        %v2397 = vpack.c.b16 %v2395, %v2394
        %v2401 = vsel %vm922, %v2379, 0
        %2403 = vmatpush.bf16.msra.mxu0 0
        %2404 = vmatpush.bf16.msra.mxu0 0
        %2405 = vmatpush.bf16.msra.mxu0 0
        %2406 = vmatpush.bf16.msra.mxu0 0
        %2407 = vmatpush.bf16.msra.mxu0 0
        %2408 = vmatpush.bf16.msra.mxu0 0
        %2409 = vmatpush.bf16.msra.mxu0 %v2397
        %2410 = vmatpush.bf16.msra.mxu0 %v2396
        %2411 = vmatmul.bf16.gmra.mxu0 %v2401
        %v2412 = vpop.f32.mrf.mxu0
        %v2413 = vadd.f32 %v2386, %v2412
        %v2414 = vpop.f32.mrf.mxu0
        %v2415 = vadd.f32 %v2386, %v2414
        %2416 = vdwg.mxu0
        %v2417 = vadd.f32 %v2413, %v899
        %v2418 = vadd.f32 %v2415, %v900
        %v2419 = vsel %vm922, %v2417, 0.0
        %2420 = vadd.xlane.f32.xlu0 %v2419
        %v2421 = vpop.xlane.xlu0 %2420
        %v2422 = vsel %vm922, %v2418, 0.0
        %2423 = vadd.xlane.f32.xlu0 %v2422
        %v2424 = vpop.xlane.xlu0 %2423
        %v2425 = vrcp.pop 32.0
        %v2426 = vmul.f32 32.0, %v2425
        %v2427 = vsub.f32 1.0, %v2426
        %v2428 = vmul.f32 %v2425, %v2427
        %v2429 = vadd.f32 %v2425, %v2428
        %vm2430 = vweird.f32 %v2425
        %v2431 = vsel %vm2430, %v2425, %v2429
        %v2432 = vmul.f32 %v2421, %v2431
        %v2433 = vmul.f32 %v2424, %v2431
        %v2434 = vsub.f32 %v2417, %v2432
        %v2435 = vsub.f32 %v2418, %v2433
        %v2436 = vmul.f32 %v2434, %v2434
        %v2437 = vmul.f32 %v2435, %v2435
        %v2438 = vsel %vm922, %v2436, 0.0
        %2439 = vadd.xlane.f32.xlu0 %v2438
        %v2440 = vpop.xlane.xlu0 %2439
        %v2441 = vsel %vm922, %v2437, 0.0
        %2442 = vadd.xlane.f32.xlu0 %v2441
        %v2443 = vpop.xlane.xlu0 %2442
        %v2444 = vmul.f32 %v2440, %v2431
        %v2445 = vmul.f32 %v2443, %v2431
        %v2446 = vadd.f32 %v2444, 1e-06
        %v2447 = vadd.f32 %v2445, 1e-06
        %v2448 = vrsqrt.pop %v2446
        %v2449 = vmul.f32 %v2448, %v2446
        %v2450 = vmul.f32 %v2449, %v2448
        %v2451 = vmul.f32 0.5, %v2450
        %v2452 = vsub.f32 1.5, %v2451
        %v2453 = vmul.f32 %v2448, %v2452
        %vm2454 = vweird.f32 %v2446
        %vm2455 = vweird.f32 %v2448
        %vm2456 = vmor %vm2454, %vm2455
        %v2457 = vsel %vm2456, %v2448, %v2453
        %v2458 = vrsqrt.pop %v2447
        %v2459 = vmul.f32 %v2458, %v2447
        %v2460 = vmul.f32 %v2459, %v2458
        %v2461 = vmul.f32 0.5, %v2460
        %v2462 = vsub.f32 1.5, %v2461
        %v2463 = vmul.f32 %v2458, %v2462
        %vm2464 = vweird.f32 %v2447
        %vm2465 = vweird.f32 %v2458
        %vm2466 = vmor %vm2464, %vm2465
        %v2467 = vsel %vm2466, %v2458, %v2463
        %v2468 = vmul.f32 %v2434, %v2457
        %v2469 = vmul.f32 %v2435, %v2467
        %v2470 = vld [vmem:[%s833] sm:$0x1]
        %v2472 = vperm.slane %v2470, 0
        %v2474 = vmul.f32 %v2468, %v2472
        %v2475 = vmul.f32 %v2469, %v2472
        %v2476 = vld [vmem:[%s711] sm:$0x1]
        %v2478 = vperm.slane %v2476, 0
        %v2480 = vadd.f32 %v2474, %v2478
        %v2481 = vadd.f32 %v2475, %v2478
        %v2482 = vpack.c.bf16 %v2481, %v2480
        %v2483 = vld [vmem:[%s838] sm:$0xf]
        %v2484 = vld [vmem:[%s838 + $0x4] sm:$0xf]
        %v2485 = vld [vmem:[%s838 + $0x8] sm:$0xf]
        %v2486 = vld [vmem:[%s838 + $0xc] sm:$0xf]
        %v2487 = vld [vmem:[%s841] sm:$0x1]
        %v2489 = vperm.slane %v2487, 0
        %v2495 = vunpack.c.l.b16 %v2483
        %v2496 = vunpack.c.l.b16 %v2484
        %v2497 = vunpack.c.l.b16 %v2485
        %v2498 = vunpack.c.l.b16 %v2486
        %v2499 = vpack.c.b16 %v2496, %v2495
        %v2500 = vpack.c.b16 %v2498, %v2497
        %v2504 = vsel %vm922, %v2482, 0
        %2506 = vmatpush.bf16.msra.mxu0 0
        %2507 = vmatpush.bf16.msra.mxu0 0
        %2508 = vmatpush.bf16.msra.mxu0 0
        %2509 = vmatpush.bf16.msra.mxu0 0
        %2510 = vmatpush.bf16.msra.mxu0 0
        %2511 = vmatpush.bf16.msra.mxu0 0
        %2512 = vmatpush.bf16.msra.mxu0 %v2500
        %2513 = vmatpush.bf16.msra.mxu0 %v2499
        %2514 = vmatmul.bf16.gmra.mxu0 %v2504
        %v2515 = vpop.f32.mrf.mxu0
        %v2516 = vadd.f32 %v2489, %v2515
        %v2517 = vpop.f32.mrf.mxu0
        %v2518 = vadd.f32 %v2489, %v2517
        %2519 = vdwg.mxu0
        %v2520 = vmax.f32 %v2516, 0.0
        %v2521 = vmax.f32 %v2518, 0.0
        %v2522 = vpack.c.bf16 %v2521, %v2520
        %v2523 = vld [vmem:[%s846] sm:$0xf]
        %v2524 = vld [vmem:[%s846 + $0x4] sm:$0xf]
        %v2525 = vld [vmem:[%s846 + $0x8] sm:$0xf]
        %v2526 = vld [vmem:[%s846 + $0xc] sm:$0xf]
        %v2527 = vld [vmem:[%s846 + $0x10] sm:$0xf]
        %v2528 = vld [vmem:[%s846 + $0x14] sm:$0xf]
        %v2529 = vld [vmem:[%s846 + $0x18] sm:$0xf]
        %v2530 = vld [vmem:[%s846 + $0x1c] sm:$0xf]
        %v2531 = vld [vmem:[%s849] sm:$0x1]
        %v2533 = vperm.slane %v2531, 0
        %v2543 = vunpack.c.l.b16 %v2523
        %v2544 = vunpack.c.l.b16 %v2524
        %v2545 = vunpack.c.l.b16 %v2525
        %v2546 = vunpack.c.l.b16 %v2526
        %v2547 = vunpack.c.l.b16 %v2527
        %v2548 = vunpack.c.l.b16 %v2528
        %v2549 = vunpack.c.l.b16 %v2529
        %v2550 = vunpack.c.l.b16 %v2530
        %v2551 = vpack.c.b16 %v2544, %v2543
        %v2552 = vpack.c.b16 %v2546, %v2545
        %v2553 = vpack.c.b16 %v2548, %v2547
        %v2554 = vpack.c.b16 %v2550, %v2549
        %vm2559 = vcmask 523264
        %v2561 = vsel %vm2559, %v2522, 0
        %2563 = vmatpush.bf16.msra.mxu0 0
        %2564 = vmatpush.bf16.msra.mxu0 0
        %2565 = vmatpush.bf16.msra.mxu0 0
        %2566 = vmatpush.bf16.msra.mxu0 0
        %2567 = vmatpush.bf16.msra.mxu0 %v2554
        %2568 = vmatpush.bf16.msra.mxu0 %v2553
        %2569 = vmatpush.bf16.msra.mxu0 %v2552
        %2570 = vmatpush.bf16.msra.mxu0 %v2551
        %2571 = vmatmul.bf16.gmra.mxu0 %v2561
        %v2572 = vpop.f32.mrf.mxu0
        %v2573 = vadd.f32 %v2533, %v2572
        %v2574 = vpop.f32.mrf.mxu0
        %v2575 = vadd.f32 %v2533, %v2574
        %2576 = vdwg.mxu0
        %v2577 = vadd.f32 %v2573, %v2480
        %v2578 = vadd.f32 %v2575, %v2481
        %v2579 = vsel %vm922, %v2577, 0.0
        %2580 = vadd.xlane.f32.xlu0 %v2579
        %v2581 = vpop.xlane.xlu0 %2580
        %v2582 = vsel %vm922, %v2578, 0.0
        %2583 = vadd.xlane.f32.xlu0 %v2582
        %v2584 = vpop.xlane.xlu0 %2583
        %v2585 = vmul.f32 %v2581, %v2431
        %v2586 = vmul.f32 %v2584, %v2431
        %v2587 = vsub.f32 %v2577, %v2585
        %v2588 = vsub.f32 %v2578, %v2586
        %v2589 = vmul.f32 %v2587, %v2587
        %v2590 = vmul.f32 %v2588, %v2588
        %v2591 = vsel %vm922, %v2589, 0.0
        %2592 = vadd.xlane.f32.xlu0 %v2591
        %v2593 = vpop.xlane.xlu0 %2592
        %v2594 = vsel %vm922, %v2590, 0.0
        %2595 = vadd.xlane.f32.xlu0 %v2594
        %v2596 = vpop.xlane.xlu0 %2595
        %v2597 = vmul.f32 %v2593, %v2431
        %v2598 = vmul.f32 %v2596, %v2431
        %v2599 = vadd.f32 %v2597, 1e-06
        %v2600 = vadd.f32 %v2598, 1e-06
        %v2601 = vrsqrt.pop %v2599
        %v2602 = vmul.f32 %v2601, %v2599
        %v2603 = vmul.f32 %v2602, %v2601
        %v2604 = vmul.f32 0.5, %v2603
        %v2605 = vsub.f32 1.5, %v2604
        %v2606 = vmul.f32 %v2601, %v2605
        %vm2607 = vweird.f32 %v2599
        %vm2608 = vweird.f32 %v2601
        %vm2609 = vmor %vm2607, %vm2608
        %v2610 = vsel %vm2609, %v2601, %v2606
        %v2611 = vrsqrt.pop %v2600
        %v2612 = vmul.f32 %v2611, %v2600
        %v2613 = vmul.f32 %v2612, %v2611
        %v2614 = vmul.f32 0.5, %v2613
        %v2615 = vsub.f32 1.5, %v2614
        %v2616 = vmul.f32 %v2611, %v2615
        %vm2617 = vweird.f32 %v2600
        %vm2618 = vweird.f32 %v2611
        %vm2619 = vmor %vm2617, %vm2618
        %v2620 = vsel %vm2619, %v2611, %v2616
        %v2621 = vmul.f32 %v2587, %v2610
        %v2622 = vmul.f32 %v2588, %v2620
        %v2623 = vld [vmem:[%s852] sm:$0x1]
        %v2625 = vperm.slane %v2623, 0
        %v2627 = vmul.f32 %v2621, %v2625
        %v2628 = vmul.f32 %v2622, %v2625
        %v2629 = vld [vmem:[%s720] sm:$0x1]
        %v2631 = vperm.slane %v2629, 0
        %v2633 = vadd.f32 %v2627, %v2631
        %v2634 = vadd.f32 %v2628, %v2631
        %2635 = vst.msk [vmem:[#allocation2] sm:$0xff] %vm922, %v2633
        %2636 = vst.msk [vmem:[#allocation2 + $0x8] sm:$0xff] %vm922, %v2634
        %2637 = vst.msk [vmem:[#allocation13] sm:$0xff] %vm922, %v2633
        %2638 = vst.msk [vmem:[#allocation13 + $0x8] sm:$0xff] %vm922, %v2634
        %s2639 = sand.u32 %s490, 1
        %s2640 = scalar_lea.sflag [#allocation15], %s2639
        %s2641 = sand.u32 %s490, 1
        %s2642 = smul.addr %s2641, 64
        %s2643 = scalar_lea.vmem [#allocation14], %s2642
        // Predicated region
        $region113: #{tpu_custom_call.1} parent=83 // pred_check
          %p2644 = pneg %p472
        $region114: #{tpu_custom_call.1} parent=83 // pred_check_branch
          %2646 = sbr.rel (%p2644) target = $region116
        $region115: #{tpu_custom_call.1} parent=83 // pred_region
          %s2647 = smul.u32 2, %s40
          %2649 = vsyncadd [#allocation5], 0
          %s2650 = smul.addr %s2647, 8
          %s2651 = scalar_lea.hbm %s16, %s2650
          %s2652 = sshll.u32 [#allocation13], 4
          %s2653 = int_to_ptr.vmem [resolvable:$true] %s2652
          %s2654 = sshll.u32 %s2651, 4
          %s2655 = int_to_ptr.hbm [resolvable:$true] %s2654
          %2660 = dma.vmem_to_hbm [thread:$0]  %s2653, 256, %s2655, [#allocation5], 128, 128, 8
        $region116: #{tpu_custom_call.1} parent=83 // pred_fallthru
          _
        // Predicated region
        $region117: #{tpu_custom_call.1} parent=83 // pred_check
          %p2661 = pneg %p500
        $region118: #{tpu_custom_call.1} parent=83 // pred_check_branch
          %2663 = sbr.rel (%p2661) target = $region120
        $region119: #{tpu_custom_call.1} parent=83 // pred_region
          %s2664 = sadd.s32 %s41, %s40
          %s2665 = smul.u32 2, %s2664
          %2667 = vsyncadd %s2640, 0
          %s2668 = smul.addr %s2665, 4
          %s2669 = smul.addr %s2668, 8
          %s2670 = scalar_lea.hbm %s17, %s2669
          %s2671 = sshll.u32 %s2643, 4
          %s2672 = int_to_ptr.vmem [resolvable:$true] %s2671
          %s2673 = sshll.u32 %s2670, 4
          %s2674 = int_to_ptr.hbm [resolvable:$true] %s2673
          %2679 = dma.vmem_to_hbm [thread:$0]  %s2672, 1024, %s2674, %s2640, 128, 128, 8
        $region120: #{tpu_custom_call.1} parent=83 // pred_fallthru
          _
        // Predicated region
        $region121: #{tpu_custom_call.1} parent=83 // pred_check
          %p2680 = pneg %p472
        $region122: #{tpu_custom_call.1} parent=83 // pred_check_branch
          %2682 = sbr.rel (%p2680) target = $region124
        $region123: #{tpu_custom_call.1} parent=83 // pred_region
          %2684 = dma.done [#allocation5], 256
        $region124: #{tpu_custom_call.1} parent=83 // pred_fallthru
          _
      $region84: #{tpu_custom_call.1} parent=5 // pred_fallthru
        _
      %p2685 = scmp.le.s32.totalorder 2, %s31
      // Predicated region
      $region125: #{tpu_custom_call.1} parent=5 // pred_check
        %p2686 = pneg %p2685
      $region126: #{tpu_custom_call.1} parent=5 // pred_check_branch
        %2688 = sbr.rel (%p2686) target = $region128
      $region127: #{tpu_custom_call.1} parent=5 // pred_region
        %s2689 = ssub.s32 %s31, 2
        // Predicated region
        $region129: #{tpu_custom_call.1} parent=127 // pred_check
          %p2690 = pneg %p506
        $region130: #{tpu_custom_call.1} parent=127 // pred_check_branch
          %2692 = sbr.rel (%p2690) target = $region132
        $region131: #{tpu_custom_call.1} parent=127 // pred_region
          %s2693 = sand.u32 %s491, 1
          %s2694 = scalar_lea.sflag [#allocation15], %s2693
          %s2695 = sand.u32 %s491, 1
          %s2696 = smul.addr %s2695, 64
          %s2697 = scalar_lea.vmem [#allocation14], %s2696
          %2699 = dma.done %s2694, 1024
        $region132: #{tpu_custom_call.1} parent=127 // pred_fallthru
          _
      $region128: #{tpu_custom_call.1} parent=5 // pred_fallthru
        _
    $region6: #{tpu_custom_call.1} parent=1 // loop_footer
      %s35 = sadd.s32 1, %s31
    $region7: #{tpu_custom_call.1} parent=1 // loop_footer_branch
      %30 = sbr.rel target = $region3
    $region8: #{tpu_custom_call.1} parent=1 // loop_exit
      _
    %2700 = vsyncpa [#allocation4], 1
    %s2701 = scalar_lea.sflag [#allocation4], 1
    %2702 = vsyncpa %s2701, 1
    %2703 = vsyncpa [#allocation7], 1
    %2704 = vsyncpa [#allocation10], 1
    %2705 = vsyncpa [#allocation5], 1
    %s2706 = scalar_lea.sflag [#allocation5], 1
    %2707 = vsyncpa %s2706, 1
    %2708 = vsyncpa [#allocation15], 1
    %s2709 = scalar_lea.sflag [#allocation15], 1
    %2710 = vsyncpa %s2709, 1

</llo_original>
